<compile_context>
chip_gen: v6e
topology: v6e:2x2x1
jax: 0.10.0
libtpu: 0.0.40
codegen_flags: <defaults>
</compile_context>

<pallas_src>
import functools
import math

import jax
import jax.numpy as jnp
from jax.experimental import pallas as pl
from jax.experimental.pallas import tpu as pltpu

IN_DIM = 34
H1, H2, H3, OUT_DIM = 64, 128, 256, 1


def _round_up(v, m):
    return m * ((v + m - 1) // m)


def _mlp_kernel(xt_ref, w1_ref, b1_ref, w2_ref, b2_ref, w3_ref, b3_ref,
                w4_ref, b4_ref, o_ref, *, matmul_dtype):
    """Features-major MLP: activations are [features, tile] (batch on lanes)."""
    mm = matmul_dtype

    x = jnp.maximum(xt_ref[...], 0).astype(mm)                          # relu(x), (34, T)

    h = jnp.dot(w1_ref[...], x, preferred_element_type=jnp.float32)     # (64, T)
    h = jnp.maximum(h + b1_ref[...], 0.0).astype(mm)                    # relu, f32 add

    h = jnp.dot(w2_ref[...], h, preferred_element_type=jnp.float32)     # (128, T)
    h = jnp.maximum(h + b2_ref[...], 0.0).astype(mm)                    # relu, f32 add

    h = jnp.dot(w3_ref[...], h, preferred_element_type=jnp.float32)     # (256, T)
    h = h + b3_ref[...]                                                 # f32, NO relu

    # hidden4 (256 -> 1): VPU multiply + reduction over the feature (sublane) axis
    # instead of a degenerate single-column MXU matmul; result is a lane-dense
    # (1, T) row that stores with full-width vst.
    y = jnp.sum(h * w4_ref[...], axis=0, keepdims=True) + b4_ref[...]   # (1, T)
    o_ref[...] = y.astype(o_ref.dtype)


def net_forward(x, params, *, batch_tile=1024, matmul_dtype=jnp.bfloat16):
    """x: [B, 34] float32 -> [B, 1] float32 (same math as the PyTorch Net)."""
    (w1, b1), (w2, b2), (w3, b3), (w4, b4) = params
    assert x.ndim == 2 and x.shape[1] == IN_DIM, "expected [B, 34] input"
    B = x.shape[0]

    # Tile selection: multiple of 256 (MXU / lane friendly on v5e/v6e/v7x),
    # capped so the grid keeps >= 2 steps when B is large enough (v7x megacore).
    tile_req = _round_up(max(int(batch_tile), 256), 256)
    half_b = _round_up(max(B // 2, 1), 256)
    tile = min(tile_req, half_b)
    Bp = _round_up(B, tile)
    grid = (Bp // tile,)

    mm = matmul_dtype

    # Features-major input: batch on the lane axis; pad batch to a tile multiple.
    xt = jnp.transpose(x.astype(mm))                                    # (34, B)
    if Bp != B:
        xt = jnp.pad(xt, ((0, 0), (0, Bp - B)))

    # Weights stay in PyTorch layout [out, in]; cast matmul operands to bf16 once.
    w1m, w2m, w3m = (w.astype(mm) for w in (w1, w2, w3))
    b1c, b2c, b3c = (b.reshape(-1, 1).astype(jnp.float32) for b in (b1, b2, b3))
    w4c = w4.reshape(-1, 1).astype(jnp.float32)                         # (256, 1), VPU path
    b4c = b4.reshape(1, 1).astype(jnp.float32)                          # (1, 1)

    def whole(shape):
        # Small weight/bias tensors: same (whole-array) block every grid step,
        # so Pallas keeps them resident and does not re-DMA them.
        return pl.BlockSpec(shape, lambda i: (0,) * len(shape))

    flops = 2 * Bp * (IN_DIM * H1 + H1 * H2 + H2 * H3 + H3 * OUT_DIM)
    bytes_accessed = (
        xt.size * xt.dtype.itemsize
        + sum(a.size * a.dtype.itemsize
              for a in (w1m, b1c, w2m, b2c, w3m, b3c, w4c, b4c))
        + Bp * OUT_DIM * 4)

    out = pl.pallas_call(
        functools.partial(_mlp_kernel, matmul_dtype=mm),
        out_shape=jax.ShapeDtypeStruct((1, Bp), jnp.float32),
        grid_spec=pltpu.PrefetchScalarGridSpec(
            num_scalar_prefetch=0,
            grid=grid,
            in_specs=[
                pl.BlockSpec((IN_DIM, tile), lambda i: (0, i)),         # x tile
                whole(w1m.shape), whole(b1c.shape),
                whole(w2m.shape), whole(b2c.shape),
                whole(w3m.shape), whole(b3c.shape),
                whole(w4c.shape), whole(b4c.shape),
            ],
            out_specs=pl.BlockSpec((1, tile), lambda i: (0, i)),        # lane-dense
        ),
        compiler_params=pltpu.CompilerParams(
            dimension_semantics=("parallel",)),
        cost_estimate=pl.CostEstimate(
            flops=flops, transcendentals=0, bytes_accessed=bytes_accessed),
    )(xt, w1m, b1c, w2m, b2c, w3m, b3c, w4c, b4c)

    return out[0, :B].reshape(B, OUT_DIM)


def init_params(key):
    """PyTorch nn.Linear default init: U(-1/sqrt(fan_in), +1/sqrt(fan_in)).
    Weights stored in PyTorch layout [out, in]; biases as [out]."""
    dims = [(IN_DIM, H1), (H1, H2), (H2, H3), (H3, OUT_DIM)]
    params = []
    for fan_in, fan_out in dims:
        key, kw, kb = jax.random.split(key, 3)
        bound = 1.0 / math.sqrt(fan_in)
        w = jax.random.uniform(kw, (fan_out, fan_in), jnp.float32, -bound, bound)
        b = jax.random.uniform(kb, (fan_out,), jnp.float32, -bound, bound)
        params.append((w, b))
    return params


def _reference_forward(x, params, matmul_dtype=jnp.float32):
    """Pure-JAX reference mirroring the kernel's dtype strategy
    (layers 1-3 matmuls in `matmul_dtype` with f32 accumulation, layer 4 in f32)."""
    (w1, b1), (w2, b2), (w3, b3), (w4, b4) = params
    mm = matmul_dtype
    h = jnp.maximum(x, 0.0).astype(mm)
    h = jnp.dot(h, w1.T.astype(mm), preferred_element_type=jnp.float32) + b1
    h = jnp.maximum(h, 0.0).astype(mm)
    h = jnp.dot(h, w2.T.astype(mm), preferred_element_type=jnp.float32) + b2
    h = jnp.maximum(h, 0.0).astype(mm)
    h = jnp.dot(h, w3.T.astype(mm), preferred_element_type=jnp.float32) + b3
    y = jnp.dot(h, w4.T.astype(jnp.float32), preferred_element_type=jnp.float32) + b4
    return y


if __name__ == "__main__":
    key = jax.random.PRNGKey(0)
    key, kx = jax.random.split(key)

    # Small, non-tile-multiple batch: exercises padding + a 2-step parallel grid.
    B = 300
    x = jax.random.normal(kx, (B, IN_DIM), jnp.float32)
    params = init_params(key)

    # Exact f32 path vs f32 reference (tight tolerance).
    out_f32 = jax.block_until_ready(net_forward(x, params, matmul_dtype=jnp.float32))
    ref_f32 = _reference_forward(x, params, jnp.float32)
    assert out_f32.shape == (B, OUT_DIM)
    assert jnp.allclose(out_f32, ref_f32, atol=1e-4, rtol=1e-4), "f32 mismatch vs reference"

    # Default fast bf16-matmul path vs matched-precision reference, plus a loose
    # sanity check against the exact f32 reference.
    out_bf16 = jax.block_until_ready(net_forward(x, params))
    ref_bf16 = _reference_forward(x, params, jnp.bfloat16)
    assert out_bf16.shape == (B, OUT_DIM)
    assert jnp.allclose(out_bf16, ref_bf16, atol=5e-3, rtol=5e-3), "bf16 mismatch vs matched reference"
    assert jnp.allclose(out_bf16, ref_f32, atol=5e-2, rtol=5e-2), "bf16 path drifted too far from f32"

    print("KERNEL_OK")
</pallas_src>

<mosaic_0001>
module attributes {stable_mosaic.version = 11 : i64} {
  func.func @_mlp_kernel(%arg0: i32, %arg1: memref<34x256xf32, #tpu.memory_space<vmem>>, %arg2: memref<64x34xf32, #tpu.memory_space<vmem>>, %arg3: memref<64x1xf32, #tpu.memory_space<vmem>>, %arg4: memref<128x64xf32, #tpu.memory_space<vmem>>, %arg5: memref<128x1xf32, #tpu.memory_space<vmem>>, %arg6: memref<256x128xf32, #tpu.memory_space<vmem>>, %arg7: memref<256x1xf32, #tpu.memory_space<vmem>>, %arg8: memref<256x1xf32, #tpu.memory_space<vmem>>, %arg9: memref<1x1xf32, #tpu.memory_space<vmem>>, %arg10: memref<1x256xf32, #tpu.memory_space<vmem>>) attributes {dimension_semantics = [#tpu.dimension_semantics<parallel>], iteration_bounds = array<i64: 2>, scalar_prefetch = 0 : i64, scratch_operands = 0 : i64, tpu.core_type = #tpu.core_type<tc>, window_params = [{transform_indices = @transform_0, window_bounds = array<i64: 34, 256>}, {pipeline_mode = #tpu.pipeline_mode<synchronous>, transform_indices = @transform_1, window_bounds = array<i64: 64, 34>}, {pipeline_mode = #tpu.pipeline_mode<synchronous>, transform_indices = @transform_2, window_bounds = array<i64: 64, 1>}, {pipeline_mode = #tpu.pipeline_mode<synchronous>, transform_indices = @transform_3, window_bounds = array<i64: 128, 64>}, {pipeline_mode = #tpu.pipeline_mode<synchronous>, transform_indices = @transform_4, window_bounds = array<i64: 128, 1>}, {pipeline_mode = #tpu.pipeline_mode<synchronous>, transform_indices = @transform_5, window_bounds = array<i64: 256, 128>}, {pipeline_mode = #tpu.pipeline_mode<synchronous>, transform_indices = @transform_6, window_bounds = array<i64: 256, 1>}, {pipeline_mode = #tpu.pipeline_mode<synchronous>, transform_indices = @transform_7, window_bounds = array<i64: 256, 1>}, {pipeline_mode = #tpu.pipeline_mode<synchronous>, transform_indices = @transform_8, window_bounds = array<i64: 1, 1>}, {transform_indices = @transform_9, window_bounds = array<i64: 1, 256>}]} {
    %c0 = arith.constant 0 : index
    %c0_0 = arith.constant 0 : index
    %0 = vector.load %arg1[%c0, %c0_0] : memref<34x256xf32, #tpu.memory_space<vmem>>, vector<34x256xf32>
    %cst = arith.constant 0.000000e+00 : f32
    %1 = vector.broadcast %cst : f32 to vector<34x256xf32>
    %2 = arith.maximumf %0, %1 : vector<34x256xf32>
    %c0_1 = arith.constant 0 : index
    %c0_2 = arith.constant 0 : index
    %3 = vector.load %arg2[%c0_1, %c0_2] : memref<64x34xf32, #tpu.memory_space<vmem>>, vector<64x34xf32>
    %cst_3 = arith.constant dense<0.000000e+00> : vector<64x256xf32>
    %4 = tpu.matmul %3, %2, %cst_3 {dimension_numbers = #tpu.dot_dimension_numbers<[1], [0], [0], [1], [0, 0, 1, 1], [], []>} : vector<64x34xf32>, vector<34x256xf32>, vector<64x256xf32> -> vector<64x256xf32>
    %c0_4 = arith.constant 0 : index
    %c0_5 = arith.constant 0 : index
    %5 = vector.load %arg3[%c0_4, %c0_5] : memref<64x1xf32, #tpu.memory_space<vmem>>, vector<64x1xf32>
    %6 = vector.broadcast %5 : vector<64x1xf32> to vector<64x256xf32>
    %7 = arith.addf %4, %6 : vector<64x256xf32>
    %cst_6 = arith.constant 0.000000e+00 : f32
    %8 = vector.broadcast %cst_6 : f32 to vector<64x256xf32>
    %9 = arith.maximumf %7, %8 : vector<64x256xf32>
    %c0_7 = arith.constant 0 : index
    %c0_8 = arith.constant 0 : index
    %10 = vector.load %arg4[%c0_7, %c0_8] : memref<128x64xf32, #tpu.memory_space<vmem>>, vector<128x64xf32>
    %cst_9 = arith.constant dense<0.000000e+00> : vector<128x256xf32>
    %11 = tpu.matmul %10, %9, %cst_9 {dimension_numbers = #tpu.dot_dimension_numbers<[1], [0], [0], [1], [0, 0, 1, 1], [], []>} : vector<128x64xf32>, vector<64x256xf32>, vector<128x256xf32> -> vector<128x256xf32>
    %c0_10 = arith.constant 0 : index
    %c0_11 = arith.constant 0 : index
    %12 = vector.load %arg5[%c0_10, %c0_11] : memref<128x1xf32, #tpu.memory_space<vmem>>, vector<128x1xf32>
    %13 = vector.broadcast %12 : vector<128x1xf32> to vector<128x256xf32>
    %14 = arith.addf %11, %13 : vector<128x256xf32>
    %cst_12 = arith.constant 0.000000e+00 : f32
    %15 = vector.broadcast %cst_12 : f32 to vector<128x256xf32>
    %16 = arith.maximumf %14, %15 : vector<128x256xf32>
    %c0_13 = arith.constant 0 : index
    %c0_14 = arith.constant 0 : index
    %17 = vector.load %arg6[%c0_13, %c0_14] : memref<256x128xf32, #tpu.memory_space<vmem>>, vector<256x128xf32>
    %cst_15 = arith.constant dense<0.000000e+00> : vector<256x256xf32>
    %18 = tpu.matmul %17, %16, %cst_15 {dimension_numbers = #tpu.dot_dimension_numbers<[1], [0], [0], [1], [0, 0, 1, 1], [], []>} : vector<256x128xf32>, vector<128x256xf32>, vector<256x256xf32> -> vector<256x256xf32>
    %c0_16 = arith.constant 0 : index
    %c0_17 = arith.constant 0 : index
    %19 = vector.load %arg7[%c0_16, %c0_17] : memref<256x1xf32, #tpu.memory_space<vmem>>, vector<256x1xf32>
    %20 = vector.broadcast %19 : vector<256x1xf32> to vector<256x256xf32>
    %21 = arith.addf %18, %20 : vector<256x256xf32>
    %c0_18 = arith.constant 0 : index
    %c0_19 = arith.constant 0 : index
    %22 = vector.load %arg8[%c0_18, %c0_19] : memref<256x1xf32, #tpu.memory_space<vmem>>, vector<256x1xf32>
    %23 = vector.broadcast %22 : vector<256x1xf32> to vector<256x256xf32>
    %24 = arith.mulf %21, %23 : vector<256x256xf32>
    %cst_20 = arith.constant dense<0.000000e+00> : vector<256xf32>
    %25 = vector.multi_reduction <add>, %24, %cst_20 [0] : vector<256x256xf32> to vector<256xf32>
    %26 = vector.shape_cast %25 : vector<256xf32> to vector<1x256xf32>
    %c0_21 = arith.constant 0 : index
    %c0_22 = arith.constant 0 : index
    %27 = vector.load %arg9[%c0_21, %c0_22] : memref<1x1xf32, #tpu.memory_space<vmem>>, vector<1x1xf32>
    %28 = vector.broadcast %27 : vector<1x1xf32> to vector<1x256xf32>
    %29 = arith.addf %26, %28 : vector<1x256xf32>
    %c0_23 = arith.constant 0 : index
    %c0_24 = arith.constant 0 : index
    %30 = vector.load %arg10[%c0_23, %c0_24] : memref<1x256xf32, #tpu.memory_space<vmem>>, vector<1x256xf32>
    tpu.vector_store %arg10[%c0_23, %c0_24], %29 {strides = array<i32>} : memref<1x256xf32, #tpu.memory_space<vmem>>, vector<1x256xf32>,
    return
  }
  func.func @transform_0(%arg0: i32) -> (i32, i32) {
    %c0_i32 = arith.constant 0 : i32
    %c0_i32_0 = arith.constant 0 : i32
    return %c0_i32, %arg0 : i32, i32
  }
  func.func @transform_1(%arg0: i32) -> (i32, i32) {
    %c0_i32 = arith.constant 0 : i32
    %c0_i32_0 = arith.constant 0 : i32
    %c0_i32_1 = arith.constant 0 : i32
    return %c0_i32, %c0_i32_0 : i32, i32
  }
  func.func @transform_2(%arg0: i32) -> (i32, i32) {
    %c0_i32 = arith.constant 0 : i32
    %c0_i32_0 = arith.constant 0 : i32
    %c0_i32_1 = arith.constant 0 : i32
    return %c0_i32, %c0_i32_0 : i32, i32
  }
  func.func @transform_3(%arg0: i32) -> (i32, i32) {
    %c0_i32 = arith.constant 0 : i32
    %c0_i32_0 = arith.constant 0 : i32
    %c0_i32_1 = arith.constant 0 : i32
    return %c0_i32, %c0_i32_0 : i32, i32
  }
  func.func @transform_4(%arg0: i32) -> (i32, i32) {
    %c0_i32 = arith.constant 0 : i32
    %c0_i32_0 = arith.constant 0 : i32
    %c0_i32_1 = arith.constant 0 : i32
    return %c0_i32, %c0_i32_0 : i32, i32
  }
  func.func @transform_5(%arg0: i32) -> (i32, i32) {
    %c0_i32 = arith.constant 0 : i32
    %c0_i32_0 = arith.constant 0 : i32
    %c0_i32_1 = arith.constant 0 : i32
    return %c0_i32, %c0_i32_0 : i32, i32
  }
  func.func @transform_6(%arg0: i32) -> (i32, i32) {
    %c0_i32 = arith.constant 0 : i32
    %c0_i32_0 = arith.constant 0 : i32
    %c0_i32_1 = arith.constant 0 : i32
    return %c0_i32, %c0_i32_0 : i32, i32
  }
  func.func @transform_7(%arg0: i32) -> (i32, i32) {
    %c0_i32 = arith.constant 0 : i32
    %c0_i32_0 = arith.constant 0 : i32
    %c0_i32_1 = arith.constant 0 : i32
    return %c0_i32, %c0_i32_0 : i32, i32
  }
  func.func @transform_8(%arg0: i32) -> (i32, i32) {
    %c0_i32 = arith.constant 0 : i32
    %c0_i32_0 = arith.constant 0 : i32
    %c0_i32_1 = arith.constant 0 : i32
    return %c0_i32, %c0_i32_0 : i32, i32
  }
  func.func @transform_9(%arg0: i32) -> (i32, i32) {
    %c0_i32 = arith.constant 0 : i32
    %c0_i32_0 = arith.constant 0 : i32
    return %c0_i32, %arg0 : i32, i32
  }
}

</mosaic_0001>

<llo_original>
// kernel: tpu_custom_call.1
$region0: #{tpu_custom_call.1}
  #allocation0 [shape = 'u32[]', space=smem, size = 0x4, offset = 0x4, fixed_abs, tag = 'smem constant byte address 0x4 - core index']
  #allocation1 [shape = 'u32[144,128]{1,0:T(1,128)}', space=vmem, size = 0x12000, scoped, tag = 'internal scratch']
  #allocation2 [shape = 'f32[1,1]{1,0:T(1,128)S(1)}', space=vmem, size = 0x200, scoped, tag = 'scoped memory for tpu_custom_call.1']
  %s0 = inlined_call_operand.vmem [shape: f32[34,512], index: 0, kind: input, shape index: {}]
  %s1 = inlined_call_operand.vmem [shape: f32[64,34], index: 1, kind: input, shape index: {}]
  %s2 = inlined_call_operand.vmem [shape: f32[64,1], index: 2, kind: input, shape index: {}]
  %s3 = inlined_call_operand.vmem [shape: f32[128,64], index: 3, kind: input, shape index: {}]
  %s4 = inlined_call_operand.vmem [shape: f32[128,1], index: 4, kind: input, shape index: {}]
  %s5 = inlined_call_operand.vmem [shape: f32[256,128], index: 5, kind: input, shape index: {}]
  %s6 = inlined_call_operand.vmem [shape: f32[256,1], index: 6, kind: input, shape index: {}]
  %s7 = inlined_call_operand.vmem [shape: f32[256,1], index: 7, kind: input, shape index: {}]
  %s8 = inlined_call_operand.<no memory space> [shape: f32[1,1], index: 8, kind: input, shape index: {}]
  %s9 = inlined_call_operand.hbm [shape: f32[1,512], index: 9, kind: output, shape index: {}]
  %s10 = sld [smem:[#allocation0]]
  $region92: #{tpu_custom_call.1} parent=0
    _
  %s12 = ssub.s32 1, %s10
  %s13 = scalar_select 0, %s12, %s10
  %v14 = vstv %s8
  %15 = vst [vmem:[#allocation2] sm:$0x1] %v14
  $region1: #{tpu_custom_call.1} parent=0
    #allocation3 [shape = 'u8[81920]{0}', space=vmem, size = 0x14000, scoped, tag = 'input window, operand 0']
    #allocation4 [shape = 'u8[2048]{0}', space=vmem, size = 0x800, scoped, tag = 'output window, operand 0']
    #allocation5 [shape = 's32[2]{0}', space=sflag, size = 0x8, scoped, tag = 'scoped memory for tpu_custom_call.1']
    %16 = vsyncpa [#allocation5], 0
    %s17 = scalar_lea.sflag [#allocation5], 1
    %18 = vsyncpa %s17, 0
    loop: start=0, step=1, limit=4
    $region2: #{tpu_custom_call.1} parent=1 // loop_pre_header
      _
    $region3: #{tpu_custom_call.1} parent=1 // loop_header
      %s20 = sphi 0, %s24
      %p21 = scmp.ge.s32.totalorder %s20, 4
      %s30 = sphi 0, %s32
      %s33 = sphi 0, %s30
      %s34 = sphi 0, %s33
      %s50 = sphi 0, %s34
      %s54 = sphi 0, %s54
      %s56 = sphi 0, %s54
      %s57 = sphi 0, %s56
      %s71 = sphi 0, %s57
      %s75 = sphi 0, %s75
      %s77 = sphi 0, %s75
      %s78 = sphi 0, %s77
      %s92 = sphi 0, %s78
      %s96 = sphi 0, %s96
      %s98 = sphi 0, %s96
      %s99 = sphi 0, %s98
      %s113 = sphi 0, %s99
      %s117 = sphi 0, %s117
      %s119 = sphi 0, %s117
      %s120 = sphi 0, %s119
      %s134 = sphi 0, %s120
      %s138 = sphi 0, %s138
      %s140 = sphi 0, %s138
      %s141 = sphi 0, %s140
      %s155 = sphi 0, %s141
      %s159 = sphi 0, %s159
      %s161 = sphi 0, %s159
      %s162 = sphi 0, %s161
      %s176 = sphi 0, %s162
      %s180 = sphi 0, %s180
      %s182 = sphi 0, %s180
      %s183 = sphi 0, %s182
      %s197 = sphi 0, %s183
      %s201 = sphi 0, %s201
      %s203 = sphi 0, %s201
      %s204 = sphi 0, %s203
      %s218 = sphi 0, %s204
      %s224 = sphi 0, %s226
      %s227 = sphi 0, %s224
      %s228 = sphi 0, %s227
      %s244 = sphi 0, %s228
    $region4: #{tpu_custom_call.1} parent=1 // loop_header_branch
      %23 = sbr.rel (%p21) target = $region8
    $region5: #{tpu_custom_call.1} parent=1 // loop_body
      %s25 = ssub.s32 %s20, 1
      %s26 = ssub.s32 %s20, 2
      %s27 = sadd.s32 %s20, 1
      %s28 = ssub.s32 %s20, %s27
      %p29 = scmp.eq.s32.totalorder %s28, 0
      %s31 = sadd.s32 %s30, 1
      %s32 = scalar_select %p29, %s30, %s31
      %p35 = pneg %p29
      %p36 = scmp.eq.s32.totalorder %s20, 1
      %p37 = por %p35, %p36
      %p38 = scmp.ne.s32.totalorder %s30, %s33
      %p39 = scmp.eq.s32.totalorder %s20, 0
      %p40 = por %p38, %p39
      %p41 = scmp.ne.s32.totalorder %s30, %s33
      %p42 = scmp.eq.s32.totalorder %s25, 1
      %p43 = por %p41, %p42
      %p44 = scmp.ne.s32.totalorder %s33, %s34
      %p45 = scmp.eq.s32.totalorder %s25, 0
      %p46 = por %p44, %p45
      %p47 = scmp.ne.s32.totalorder %s33, %s34
      %p48 = scmp.eq.s32.totalorder %s26, 1
      %p49 = por %p47, %p48
      %p51 = scmp.ne.s32.totalorder %s34, %s50
      %p52 = scmp.eq.s32.totalorder %s26, 0
      %p53 = por %p51, %p52
      %s55 = sadd.s32 %s54, 1
      %p58 = scmp.eq.s32.totalorder %s20, 1
      %p59 = scmp.ne.s32.totalorder %s54, %s56
      %p60 = scmp.eq.s32.totalorder %s20, 0
      %p61 = por %p59, %p60
      %p62 = scmp.ne.s32.totalorder %s54, %s56
      %p63 = scmp.eq.s32.totalorder %s25, 1
      %p64 = por %p62, %p63
      %p65 = scmp.ne.s32.totalorder %s56, %s57
      %p66 = scmp.eq.s32.totalorder %s25, 0
      %p67 = por %p65, %p66
      %p68 = scmp.ne.s32.totalorder %s56, %s57
      %p69 = scmp.eq.s32.totalorder %s26, 1
      %p70 = por %p68, %p69
      %p72 = scmp.ne.s32.totalorder %s57, %s71
      %p73 = scmp.eq.s32.totalorder %s26, 0
      %p74 = por %p72, %p73
      %s76 = sadd.s32 %s75, 1
      %p79 = scmp.eq.s32.totalorder %s20, 1
      %p80 = scmp.ne.s32.totalorder %s75, %s77
      %p81 = scmp.eq.s32.totalorder %s20, 0
      %p82 = por %p80, %p81
      %p83 = scmp.ne.s32.totalorder %s75, %s77
      %p84 = scmp.eq.s32.totalorder %s25, 1
      %p85 = por %p83, %p84
      %p86 = scmp.ne.s32.totalorder %s77, %s78
      %p87 = scmp.eq.s32.totalorder %s25, 0
      %p88 = por %p86, %p87
      %p89 = scmp.ne.s32.totalorder %s77, %s78
      %p90 = scmp.eq.s32.totalorder %s26, 1
      %p91 = por %p89, %p90
      %p93 = scmp.ne.s32.totalorder %s78, %s92
      %p94 = scmp.eq.s32.totalorder %s26, 0
      %p95 = por %p93, %p94
      %s97 = sadd.s32 %s96, 1
      %p100 = scmp.eq.s32.totalorder %s20, 1
      %p101 = scmp.ne.s32.totalorder %s96, %s98
      %p102 = scmp.eq.s32.totalorder %s20, 0
      %p103 = por %p101, %p102
      %p104 = scmp.ne.s32.totalorder %s96, %s98
      %p105 = scmp.eq.s32.totalorder %s25, 1
      %p106 = por %p104, %p105
      %p107 = scmp.ne.s32.totalorder %s98, %s99
      %p108 = scmp.eq.s32.totalorder %s25, 0
      %p109 = por %p107, %p108
      %p110 = scmp.ne.s32.totalorder %s98, %s99
      %p111 = scmp.eq.s32.totalorder %s26, 1
      %p112 = por %p110, %p111
      %p114 = scmp.ne.s32.totalorder %s99, %s113
      %p115 = scmp.eq.s32.totalorder %s26, 0
      %p116 = por %p114, %p115
      %s118 = sadd.s32 %s117, 1
      %p121 = scmp.eq.s32.totalorder %s20, 1
      %p122 = scmp.ne.s32.totalorder %s117, %s119
      %p123 = scmp.eq.s32.totalorder %s20, 0
      %p124 = por %p122, %p123
      %p125 = scmp.ne.s32.totalorder %s117, %s119
      %p126 = scmp.eq.s32.totalorder %s25, 1
      %p127 = por %p125, %p126
      %p128 = scmp.ne.s32.totalorder %s119, %s120
      %p129 = scmp.eq.s32.totalorder %s25, 0
      %p130 = por %p128, %p129
      %p131 = scmp.ne.s32.totalorder %s119, %s120
      %p132 = scmp.eq.s32.totalorder %s26, 1
      %p133 = por %p131, %p132
      %p135 = scmp.ne.s32.totalorder %s120, %s134
      %p136 = scmp.eq.s32.totalorder %s26, 0
      %p137 = por %p135, %p136
      %s139 = sadd.s32 %s138, 1
      %p142 = scmp.eq.s32.totalorder %s20, 1
      %p143 = scmp.ne.s32.totalorder %s138, %s140
      %p144 = scmp.eq.s32.totalorder %s20, 0
      %p145 = por %p143, %p144
      %p146 = scmp.ne.s32.totalorder %s138, %s140
      %p147 = scmp.eq.s32.totalorder %s25, 1
      %p148 = por %p146, %p147
      %p149 = scmp.ne.s32.totalorder %s140, %s141
      %p150 = scmp.eq.s32.totalorder %s25, 0
      %p151 = por %p149, %p150
      %p152 = scmp.ne.s32.totalorder %s140, %s141
      %p153 = scmp.eq.s32.totalorder %s26, 1
      %p154 = por %p152, %p153
      %p156 = scmp.ne.s32.totalorder %s141, %s155
      %p157 = scmp.eq.s32.totalorder %s26, 0
      %p158 = por %p156, %p157
      %s160 = sadd.s32 %s159, 1
      %p163 = scmp.eq.s32.totalorder %s20, 1
      %p164 = scmp.ne.s32.totalorder %s159, %s161
      %p165 = scmp.eq.s32.totalorder %s20, 0
      %p166 = por %p164, %p165
      %p167 = scmp.ne.s32.totalorder %s159, %s161
      %p168 = scmp.eq.s32.totalorder %s25, 1
      %p169 = por %p167, %p168
      %p170 = scmp.ne.s32.totalorder %s161, %s162
      %p171 = scmp.eq.s32.totalorder %s25, 0
      %p172 = por %p170, %p171
      %p173 = scmp.ne.s32.totalorder %s161, %s162
      %p174 = scmp.eq.s32.totalorder %s26, 1
      %p175 = por %p173, %p174
      %p177 = scmp.ne.s32.totalorder %s162, %s176
      %p178 = scmp.eq.s32.totalorder %s26, 0
      %p179 = por %p177, %p178
      %s181 = sadd.s32 %s180, 1
      %p184 = scmp.eq.s32.totalorder %s20, 1
      %p185 = scmp.ne.s32.totalorder %s180, %s182
      %p186 = scmp.eq.s32.totalorder %s20, 0
      %p187 = por %p185, %p186
      %p188 = scmp.ne.s32.totalorder %s180, %s182
      %p189 = scmp.eq.s32.totalorder %s25, 1
      %p190 = por %p188, %p189
      %p191 = scmp.ne.s32.totalorder %s182, %s183
      %p192 = scmp.eq.s32.totalorder %s25, 0
      %p193 = por %p191, %p192
      %p194 = scmp.ne.s32.totalorder %s182, %s183
      %p195 = scmp.eq.s32.totalorder %s26, 1
      %p196 = por %p194, %p195
      %p198 = scmp.ne.s32.totalorder %s183, %s197
      %p199 = scmp.eq.s32.totalorder %s26, 0
      %p200 = por %p198, %p199
      %s202 = sadd.s32 %s201, 1
      %p205 = scmp.eq.s32.totalorder %s20, 1
      %p206 = scmp.ne.s32.totalorder %s201, %s203
      %p207 = scmp.eq.s32.totalorder %s20, 0
      %p208 = por %p206, %p207
      %p209 = scmp.ne.s32.totalorder %s201, %s203
      %p210 = scmp.eq.s32.totalorder %s25, 1
      %p211 = por %p209, %p210
      %p212 = scmp.ne.s32.totalorder %s203, %s204
      %p213 = scmp.eq.s32.totalorder %s25, 0
      %p214 = por %p212, %p213
      %p215 = scmp.ne.s32.totalorder %s203, %s204
      %p216 = scmp.eq.s32.totalorder %s26, 1
      %p217 = por %p215, %p216
      %p219 = scmp.ne.s32.totalorder %s204, %s218
      %p220 = scmp.eq.s32.totalorder %s26, 0
      %p221 = por %p219, %p220
      %s222 = ssub.s32 %s20, %s27
      %p223 = scmp.eq.s32.totalorder %s222, 0
      %s225 = sadd.s32 %s224, 1
      %s226 = scalar_select %p223, %s224, %s225
      %p229 = pneg %p223
      %p230 = scmp.eq.s32.totalorder %s20, 1
      %p231 = por %p229, %p230
      %p232 = scmp.ne.s32.totalorder %s224, %s227
      %p233 = scmp.eq.s32.totalorder %s20, 0
      %p234 = por %p232, %p233
      %p235 = scmp.ne.s32.totalorder %s224, %s227
      %p236 = scmp.eq.s32.totalorder %s25, 1
      %p237 = por %p235, %p236
      %p238 = scmp.ne.s32.totalorder %s227, %s228
      %p239 = scmp.eq.s32.totalorder %s25, 0
      %p240 = por %p238, %p239
      %p241 = scmp.ne.s32.totalorder %s227, %s228
      %p242 = scmp.eq.s32.totalorder %s26, 1
      %p243 = por %p241, %p242
      %p245 = scmp.ne.s32.totalorder %s228, %s244
      %p246 = scmp.eq.s32.totalorder %s26, 0
      %p247 = por %p245, %p246
      %p248 = scmp.le.s32.totalorder 1, %s20
      %p249 = scmp.lt.s32.totalorder %s20, 3
      %p250 = pnand %p248, %p249
      %p251 = pneg %p250
      // Predicated region
      $region9: #{tpu_custom_call.1} parent=5 // pred_check
        _
      $region10: #{tpu_custom_call.1} parent=5 // pred_check_branch
        %253 = sbr.rel (%p250) target = $region12
      $region11: #{tpu_custom_call.1} parent=5 // pred_region
        %s254 = ssub.s32 %s20, 1
        // Predicated region
        $region13: #{tpu_custom_call.1} parent=11 // pred_check
          %p255 = pneg %p67
        $region14: #{tpu_custom_call.1} parent=11 // pred_check_branch
          %257 = sbr.rel (%p255) target = $region16
        $region15: #{tpu_custom_call.1} parent=11 // pred_region
          _
        $region16: #{tpu_custom_call.1} parent=11 // pred_fallthru
          _
        // Predicated region
        $region17: #{tpu_custom_call.1} parent=11 // pred_check
          %p258 = pneg %p88
        $region18: #{tpu_custom_call.1} parent=11 // pred_check_branch
          %260 = sbr.rel (%p258) target = $region20
        $region19: #{tpu_custom_call.1} parent=11 // pred_region
          _
        $region20: #{tpu_custom_call.1} parent=11 // pred_fallthru
          _
        // Predicated region
        $region21: #{tpu_custom_call.1} parent=11 // pred_check
          %p261 = pneg %p109
        $region22: #{tpu_custom_call.1} parent=11 // pred_check_branch
          %263 = sbr.rel (%p261) target = $region24
        $region23: #{tpu_custom_call.1} parent=11 // pred_region
          _
        $region24: #{tpu_custom_call.1} parent=11 // pred_fallthru
          _
        // Predicated region
        $region25: #{tpu_custom_call.1} parent=11 // pred_check
          %p264 = pneg %p130
        $region26: #{tpu_custom_call.1} parent=11 // pred_check_branch
          %266 = sbr.rel (%p264) target = $region28
        $region27: #{tpu_custom_call.1} parent=11 // pred_region
          _
        $region28: #{tpu_custom_call.1} parent=11 // pred_fallthru
          _
        // Predicated region
        $region29: #{tpu_custom_call.1} parent=11 // pred_check
          %p267 = pneg %p151
        $region30: #{tpu_custom_call.1} parent=11 // pred_check_branch
          %269 = sbr.rel (%p267) target = $region32
        $region31: #{tpu_custom_call.1} parent=11 // pred_region
          _
        $region32: #{tpu_custom_call.1} parent=11 // pred_fallthru
          _
        // Predicated region
        $region33: #{tpu_custom_call.1} parent=11 // pred_check
          %p270 = pneg %p172
        $region34: #{tpu_custom_call.1} parent=11 // pred_check_branch
          %272 = sbr.rel (%p270) target = $region36
        $region35: #{tpu_custom_call.1} parent=11 // pred_region
          _
        $region36: #{tpu_custom_call.1} parent=11 // pred_fallthru
          _
        // Predicated region
        $region37: #{tpu_custom_call.1} parent=11 // pred_check
          %p273 = pneg %p193
        $region38: #{tpu_custom_call.1} parent=11 // pred_check_branch
          %275 = sbr.rel (%p273) target = $region40
        $region39: #{tpu_custom_call.1} parent=11 // pred_region
          _
        $region40: #{tpu_custom_call.1} parent=11 // pred_fallthru
          _
        // Predicated region
        $region41: #{tpu_custom_call.1} parent=11 // pred_check
          %p276 = pneg %p214
        $region42: #{tpu_custom_call.1} parent=11 // pred_check_branch
          %278 = sbr.rel (%p276) target = $region44
        $region43: #{tpu_custom_call.1} parent=11 // pred_region
          _
        $region44: #{tpu_custom_call.1} parent=11 // pred_fallthru
          _
      $region12: #{tpu_custom_call.1} parent=5 // pred_fallthru
        _
      %p279 = scmp.lt.s32.totalorder %s20, 2
      // Predicated region
      $region45: #{tpu_custom_call.1} parent=5 // pred_check
        %p280 = pneg %p279
      $region46: #{tpu_custom_call.1} parent=5 // pred_check_branch
        %282 = sbr.rel (%p280) target = $region48
      $region47: #{tpu_custom_call.1} parent=5 // pred_region
        // Predicated region
        $region49: #{tpu_custom_call.1} parent=47 // pred_check
          %p283 = pneg %p40
        $region50: #{tpu_custom_call.1} parent=47 // pred_check_branch
          %285 = sbr.rel (%p283) target = $region52
        $region51: #{tpu_custom_call.1} parent=47 // pred_region
          %s286 = sand.u32 %s30, 1
          %s287 = sand.u32 %s30, 1
          %s288 = smul.addr %s287, 80
          %s289 = scalar_lea.vmem [#allocation3], %s288
          %s290 = smul.u32 2, %s20
          %s291 = smul.addr %s290, 8
          %s292 = scalar_lea.vmem %s0, %s291
          // Predicated region
          $region53: #{tpu_custom_call.1} parent=51 // pred_check
            _
          $region54: #{tpu_custom_call.1} parent=51 // pred_check_branch
            %294 = sbr.rel (0) target = $region56
          $region55: #{tpu_custom_call.1} parent=51 // pred_region
            // Predicated region
            $region57: #{tpu_custom_call.1} parent=55 // pred_check
              _
            $region58: #{tpu_custom_call.1} parent=55 // pred_check_branch
              %296 = sbr.rel (0) target = $region60
            $region59: #{tpu_custom_call.1} parent=55 // pred_region
              loop: start=0, step=1, limit=1
              $region61: #{tpu_custom_call.1} parent=59 // loop_pre_header
                _
              $region62: #{tpu_custom_call.1} parent=59 // loop_header
                %s298 = sphi 0, %s302
                %p299 = scmp.ge.s32.totalorder %s298, 1
                %s303 = sphi %s292, %s292
                %s304 = sphi %s289, %s289
              $region63: #{tpu_custom_call.1} parent=59 // loop_header_branch
                %301 = sbr.rel (%p299) target = $region67
              $region64: #{tpu_custom_call.1} parent=59 // loop_body
                %v305 = vld [vmem:[%s303] sm:$0xff]
                %306 = vst [vmem:[%s304] sm:$0xff] %v305
                %v307 = vld [vmem:[%s303 + $0x8] sm:$0xff]
                %308 = vst [vmem:[%s304 + $0x8] sm:$0xff] %v307
                %v309 = vld [vmem:[%s303 + $0x20] sm:$0xff]
                %310 = vst [vmem:[%s304 + $0x10] sm:$0xff] %v309
                %v311 = vld [vmem:[%s303 + $0x28] sm:$0xff]
                %312 = vst [vmem:[%s304 + $0x18] sm:$0xff] %v311
                %v313 = vld [vmem:[%s303 + $0x40] sm:$0xff]
                %314 = vst [vmem:[%s304 + $0x20] sm:$0xff] %v313
                %v315 = vld [vmem:[%s303 + $0x48] sm:$0xff]
                %316 = vst [vmem:[%s304 + $0x28] sm:$0xff] %v315
                %v317 = vld [vmem:[%s303 + $0x60] sm:$0xff]
                %318 = vst [vmem:[%s304 + $0x30] sm:$0xff] %v317
                %v319 = vld [vmem:[%s303 + $0x68] sm:$0xff]
                %320 = vst [vmem:[%s304 + $0x38] sm:$0xff] %v319
                %v321 = vld [vmem:[%s303 + $0x80] sm:$0xff]
                %322 = vst [vmem:[%s304 + $0x40] sm:$0xff] %v321
                %v323 = vld [vmem:[%s303 + $0x88] sm:$0xff]
                %324 = vst [vmem:[%s304 + $0x48] sm:$0xff] %v323
              $region65: #{tpu_custom_call.1} parent=59 // loop_footer
                %s302 = sadd.s32 1, %s298
              $region66: #{tpu_custom_call.1} parent=59 // loop_footer_branch
                %297 = sbr.rel target = $region62
              $region67: #{tpu_custom_call.1} parent=59 // loop_exit
                _
            $region60: #{tpu_custom_call.1} parent=55 // pred_fallthru
              _
            // Predicated region
            $region68: #{tpu_custom_call.1} parent=55 // pred_check
              _
            $region69: #{tpu_custom_call.1} parent=55 // pred_check_branch
              %326 = sbr.rel target = $region71
            $region70: #{tpu_custom_call.1} parent=55 // pred_region
              _
            $region71: #{tpu_custom_call.1} parent=55 // pred_fallthru
              _
          $region56: #{tpu_custom_call.1} parent=51 // pred_fallthru
            _
          %327 = vnop
        $region52: #{tpu_custom_call.1} parent=47 // pred_fallthru
          _
      $region48: #{tpu_custom_call.1} parent=5 // pred_fallthru
        _
      %p328 = scmp.le.s32.totalorder 1, %s20
      %p329 = scmp.lt.s32.totalorder %s20, 3
      %p330 = pnand %p328, %p329
      %p331 = pneg %p330
      // Predicated region
      $region72: #{tpu_custom_call.1} parent=5 // pred_check
        _
      $region73: #{tpu_custom_call.1} parent=5 // pred_check_branch
        %333 = sbr.rel (%p330) target = $region75
      $region74: #{tpu_custom_call.1} parent=5 // pred_region
        %s334 = ssub.s32 %s20, 1
        %s335 = sand.u32 %s33, 1
        %s336 = sand.u32 %s33, 1
        %s337 = smul.addr %s336, 80
        %s338 = scalar_lea.vmem [#allocation3], %s337
        // Predicated region
        $region76: #{tpu_custom_call.1} parent=74 // pred_check
          %p339 = pneg %p46
        $region77: #{tpu_custom_call.1} parent=74 // pred_check_branch
          %341 = sbr.rel (%p339) target = $region79
        $region78: #{tpu_custom_call.1} parent=74 // pred_region
          _
        $region79: #{tpu_custom_call.1} parent=74 // pred_fallthru
          _
        %s342 = sand.u32 %s33, 1
        %s343 = sand.u32 %s33, 1
        %s344 = smul.addr %s343, 80
        %s345 = scalar_lea.vmem [#allocation3], %s344
        %p346 = pneg %p46
        %p347 = pneg %p43
        %p348 = pneg %p67
        %p349 = pneg %p64
        %p350 = pneg %p88
        %p351 = pneg %p85
        %p352 = pneg %p109
        %p353 = pneg %p106
        %p354 = pneg %p130
        %p355 = pneg %p127
        %p356 = pneg %p151
        %p357 = pneg %p148
        %p358 = pneg %p172
        %p359 = pneg %p169
        %p360 = pneg %p193
        %p361 = pneg %p190
        %p362 = pneg %p214
        %p363 = pneg %p211
        %p364 = pneg %p240
        %p365 = pneg %p237
        %s366 = sand.u32 %s227, 1
        %s367 = scalar_lea.sflag [#allocation5], %s366
        %s368 = sand.u32 %s227, 1
        %s369 = smul.addr %s368, 2
        %s370 = scalar_lea.vmem [#allocation4], %s369
        %s371 = smul.u32 2, %s25
        %s372 = smul.u32 2, %s25
        %v373 = vld [vmem:[%s338] sm:$0xff]
        %v374 = vld [vmem:[%s338 + $0x8] sm:$0xff]
        %v375 = vld [vmem:[%s338 + $0x10] sm:$0xff]
        %v376 = vld [vmem:[%s338 + $0x18] sm:$0xff]
        %v377 = vld [vmem:[%s338 + $0x20] sm:$0xff]
        %v378 = vld [vmem:[%s338 + $0x28] sm:$0xff]
        %v379 = vld [vmem:[%s338 + $0x30] sm:$0xff]
        %v380 = vld [vmem:[%s338 + $0x38] sm:$0xff]
        %v381 = vld [vmem:[%s338 + $0x40] sm:$0x3]
        %v382 = vld [vmem:[%s338 + $0x48] sm:$0x3]
        %v383 = vmax.f32 %v373, 0.0
        %v384 = vmax.f32 %v374, 0.0
        %v385 = vmax.f32 %v375, 0.0
        %v386 = vmax.f32 %v376, 0.0
        %v387 = vmax.f32 %v377, 0.0
        %v388 = vmax.f32 %v378, 0.0
        %v389 = vmax.f32 %v379, 0.0
        %v390 = vmax.f32 %v380, 0.0
        %v391 = vmax.f32 %v381, 0.0
        %v392 = vmax.f32 %v382, 0.0
        %v393 = vld [vmem:[%s1] sm:$0xff]
        %v394 = vld [vmem:[%s1 + $0x8] sm:$0xff]
        %v395 = vld [vmem:[%s1 + $0x10] sm:$0xff]
        %v396 = vld [vmem:[%s1 + $0x18] sm:$0xff]
        %v397 = vld [vmem:[%s1 + $0x20] sm:$0xff]
        %v398 = vld [vmem:[%s1 + $0x28] sm:$0xff]
        %v399 = vld [vmem:[%s1 + $0x30] sm:$0xff]
        %v400 = vld [vmem:[%s1 + $0x38] sm:$0xff]
        %v401 = vld [vmem:[%s2] sm:$0xff]
        %v402 = vld [vmem:[%s2 + $0x8] sm:$0xff]
        %v403 = vld [vmem:[%s2 + $0x10] sm:$0xff]
        %v404 = vld [vmem:[%s2 + $0x18] sm:$0xff]
        %v405 = vld [vmem:[%s2 + $0x20] sm:$0xff]
        %v406 = vld [vmem:[%s2 + $0x28] sm:$0xff]
        %v407 = vld [vmem:[%s2 + $0x30] sm:$0xff]
        %v408 = vld [vmem:[%s2 + $0x38] sm:$0xff]
        %410 = vset.pattern.permute.xlu0 0
        %411 = vperm.xlu0 %410, %v401
        %v412 = vpop.permute.xlu0 %411
        %415 = vset.pattern.permute.xlu0 0
        %416 = vperm.xlu0 %415, %v402
        %v417 = vpop.permute.xlu0 %416
        %420 = vset.pattern.permute.xlu0 0
        %421 = vperm.xlu0 %420, %v403
        %v422 = vpop.permute.xlu0 %421
        %425 = vset.pattern.permute.xlu0 0
        %426 = vperm.xlu0 %425, %v404
        %v427 = vpop.permute.xlu0 %426
        %430 = vset.pattern.permute.xlu0 0
        %431 = vperm.xlu0 %430, %v405
        %v432 = vpop.permute.xlu0 %431
        %435 = vset.pattern.permute.xlu0 0
        %436 = vperm.xlu0 %435, %v406
        %v437 = vpop.permute.xlu0 %436
        %440 = vset.pattern.permute.xlu0 0
        %441 = vperm.xlu0 %440, %v407
        %v442 = vpop.permute.xlu0 %441
        %445 = vset.pattern.permute.xlu0 0
        %446 = vperm.xlu0 %445, %v408
        %v447 = vpop.permute.xlu0 %446
        %vm449 = vcmask 277504
        %v451 = vsel %vm449, %v393, 0
        %v454 = vsel %vm449, %v394, 0
        %v457 = vsel %vm449, %v395, 0
        %v460 = vsel %vm449, %v396, 0
        %v463 = vsel %vm449, %v397, 0
        %v466 = vsel %vm449, %v398, 0
        %v469 = vsel %vm449, %v399, 0
        %v472 = vsel %vm449, %v400, 0
        %vm474 = vcmask 1041408
        %v476 = vsel %vm474, %v391, 0
        %v479 = vsel %vm474, %v392, 0
        %481 = vmatprep.subr.mxu0 0.0
        %482 = vmatpush1.msra.mxu0 0.0
        %483 = vmatprep.subr.mxu0 0.0
        %484 = vmatpush1.msra.mxu0 0.0
        %485 = vmatprep.subr.mxu0 0.0
        %486 = vmatpush1.msra.mxu0 0.0
        %487 = vmatprep.subr.mxu0 0.0
        %488 = vmatpush1.msra.mxu0 0.0
        %489 = vmatprep.subr.mxu0 0.0
        %490 = vmatpush1.msra.mxu0 0.0
        %491 = vmatprep.subr.mxu0 0.0
        %492 = vmatpush1.msra.mxu0 0.0
        %493 = vmatprep.subr.mxu0 0.0
        %494 = vmatpush1.msra.mxu0 0.0
        %495 = vmatprep.subr.mxu0 0.0
        %496 = vmatpush1.msra.mxu0 0.0
        %497 = vmatprep.subr.mxu0 0.0
        %498 = vmatpush1.msra.mxu0 0.0
        %499 = vmatprep.subr.mxu0 0.0
        %500 = vmatpush1.msra.mxu0 0.0
        %501 = vmatprep.subr.mxu0 0.0
        %502 = vmatpush1.msra.mxu0 0.0
        %503 = vmatprep.subr.mxu0 %v479
        %504 = vmatpush1.msra.mxu0 %v476
        %505 = vmatprep.subr.mxu0 %v390
        %506 = vmatpush1.msra.mxu0 %v389
        %507 = vmatprep.subr.mxu0 %v388
        %508 = vmatpush1.msra.mxu0 %v387
        %509 = vmatprep.subr.mxu0 %v386
        %510 = vmatpush1.msra.mxu0 %v385
        %511 = vmatprep.subr.mxu0 %v384
        %512 = vmatpush1.msra.mxu0 %v383
        %513 = vmatprep.subr.mxu0 0.0
        %514 = vmatpush2.msra.mxu0 0.0
        %515 = vmatprep.subr.mxu0 0.0
        %516 = vmatpush2.msra.mxu0 0.0
        %517 = vmatprep.subr.mxu0 0.0
        %518 = vmatpush2.msra.mxu0 0.0
        %519 = vmatprep.subr.mxu0 0.0
        %520 = vmatpush2.msra.mxu0 0.0
        %521 = vmatprep.subr.mxu0 0.0
        %522 = vmatpush2.msra.mxu0 0.0
        %523 = vmatprep.subr.mxu0 0.0
        %524 = vmatpush2.msra.mxu0 0.0
        %525 = vmatprep.subr.mxu0 0.0
        %526 = vmatpush2.msra.mxu0 0.0
        %527 = vmatprep.subr.mxu0 0.0
        %528 = vmatpush2.msra.mxu0 0.0
        %529 = vmatprep.subr.mxu0 0.0
        %530 = vmatpush2.msra.mxu0 0.0
        %531 = vmatprep.subr.mxu0 0.0
        %532 = vmatpush2.msra.mxu0 0.0
        %533 = vmatprep.subr.mxu0 0.0
        %534 = vmatpush2.msra.mxu0 0.0
        %535 = vmatprep.subr.mxu0 0.0
        %536 = vmatpush2.msra.mxu0 0.0
        %537 = vmatprep.subr.mxu0 0.0
        %538 = vmatpush2.msra.mxu0 0.0
        %539 = vmatprep.subr.mxu0 0.0
        %540 = vmatpush2.msra.mxu0 0.0
        %541 = vmatprep.subr.mxu0 0.0
        %542 = vmatpush2.msra.mxu0 0.0
        %543 = vmatprep.subr.mxu0 0.0
        %544 = vmatpush2.msra.mxu0 0.0
        %545 = vmatprep.mubr.f32.mxu0 0.0
        %546 = vmatmul.mubr.f32.gmra.mxu0 %v451
        %v547 = vpop.f32.mrf.mxu0
        %v548 = vadd.f32 %v412, %v547
        %v549 = vpop.f32.mrf.mxu0
        %v550 = vadd.f32 %v412, %v549
        %551 = vmatprep.mubr.f32.mxu0 0.0
        %552 = vmatmul.mubr.f32.gmra.mxu0 %v454
        %v553 = vpop.f32.mrf.mxu0
        %v554 = vadd.f32 %v417, %v553
        %v555 = vpop.f32.mrf.mxu0
        %v556 = vadd.f32 %v417, %v555
        %557 = vmatprep.mubr.f32.mxu0 0.0
        %558 = vmatmul.mubr.f32.gmra.mxu0 %v457
        %v559 = vpop.f32.mrf.mxu0
        %v560 = vadd.f32 %v422, %v559
        %v561 = vpop.f32.mrf.mxu0
        %v562 = vadd.f32 %v422, %v561
        %563 = vmatprep.mubr.f32.mxu0 0.0
        %564 = vmatmul.mubr.f32.gmra.mxu0 %v460
        %v565 = vpop.f32.mrf.mxu0
        %v566 = vadd.f32 %v427, %v565
        %v567 = vpop.f32.mrf.mxu0
        %v568 = vadd.f32 %v427, %v567
        %569 = vmatprep.mubr.f32.mxu0 0.0
        %570 = vmatmul.mubr.f32.gmra.mxu0 %v463
        %v571 = vpop.f32.mrf.mxu0
        %v572 = vadd.f32 %v432, %v571
        %v573 = vpop.f32.mrf.mxu0
        %v574 = vadd.f32 %v432, %v573
        %575 = vmatprep.mubr.f32.mxu0 0.0
        %576 = vmatmul.mubr.f32.gmra.mxu0 %v466
        %v577 = vpop.f32.mrf.mxu0
        %v578 = vadd.f32 %v437, %v577
        %v579 = vpop.f32.mrf.mxu0
        %v580 = vadd.f32 %v437, %v579
        %581 = vmatprep.mubr.f32.mxu0 0.0
        %582 = vmatmul.mubr.f32.gmra.mxu0 %v469
        %v583 = vpop.f32.mrf.mxu0
        %v584 = vadd.f32 %v442, %v583
        %v585 = vpop.f32.mrf.mxu0
        %v586 = vadd.f32 %v442, %v585
        %587 = vmatprep.mubr.f32.mxu0 0.0
        %588 = vmatmul.mubr.f32.gmra.mxu0 %v472
        %v589 = vpop.f32.mrf.mxu0
        %v590 = vadd.f32 %v447, %v589
        %v591 = vpop.f32.mrf.mxu0
        %v592 = vadd.f32 %v447, %v591
        %593 = vdwg.mxu0
        %v594 = vmax.f32 %v548, 0.0
        %v595 = vmax.f32 %v550, 0.0
        %v596 = vmax.f32 %v554, 0.0
        %v597 = vmax.f32 %v556, 0.0
        %v598 = vmax.f32 %v560, 0.0
        %v599 = vmax.f32 %v562, 0.0
        %v600 = vmax.f32 %v566, 0.0
        %v601 = vmax.f32 %v568, 0.0
        %v602 = vmax.f32 %v572, 0.0
        %v603 = vmax.f32 %v574, 0.0
        %v604 = vmax.f32 %v578, 0.0
        %v605 = vmax.f32 %v580, 0.0
        %v606 = vmax.f32 %v584, 0.0
        %v607 = vmax.f32 %v586, 0.0
        %v608 = vmax.f32 %v590, 0.0
        %v609 = vmax.f32 %v592, 0.0
        %v610 = vld [vmem:[%s3] sm:$0xff]
        %v611 = vld [vmem:[%s3 + $0x8] sm:$0xff]
        %v612 = vld [vmem:[%s3 + $0x10] sm:$0xff]
        %v613 = vld [vmem:[%s3 + $0x18] sm:$0xff]
        %v614 = vld [vmem:[%s3 + $0x20] sm:$0xff]
        %v615 = vld [vmem:[%s3 + $0x28] sm:$0xff]
        %v616 = vld [vmem:[%s3 + $0x30] sm:$0xff]
        %v617 = vld [vmem:[%s3 + $0x38] sm:$0xff]
        %v618 = vld [vmem:[%s3 + $0x40] sm:$0xff]
        %v619 = vld [vmem:[%s3 + $0x48] sm:$0xff]
        %v620 = vld [vmem:[%s3 + $0x50] sm:$0xff]
        %v621 = vld [vmem:[%s3 + $0x58] sm:$0xff]
        %v622 = vld [vmem:[%s3 + $0x60] sm:$0xff]
        %v623 = vld [vmem:[%s3 + $0x68] sm:$0xff]
        %v624 = vld [vmem:[%s3 + $0x70] sm:$0xff]
        %v625 = vld [vmem:[%s3 + $0x78] sm:$0xff]
        %v626 = vld [vmem:[%s4] sm:$0xff]
        %v627 = vld [vmem:[%s4 + $0x8] sm:$0xff]
        %v628 = vld [vmem:[%s4 + $0x10] sm:$0xff]
        %v629 = vld [vmem:[%s4 + $0x18] sm:$0xff]
        %v630 = vld [vmem:[%s4 + $0x20] sm:$0xff]
        %v631 = vld [vmem:[%s4 + $0x28] sm:$0xff]
        %v632 = vld [vmem:[%s4 + $0x30] sm:$0xff]
        %v633 = vld [vmem:[%s4 + $0x38] sm:$0xff]
        %v634 = vld [vmem:[%s4 + $0x40] sm:$0xff]
        %v635 = vld [vmem:[%s4 + $0x48] sm:$0xff]
        %v636 = vld [vmem:[%s4 + $0x50] sm:$0xff]
        %v637 = vld [vmem:[%s4 + $0x58] sm:$0xff]
        %v638 = vld [vmem:[%s4 + $0x60] sm:$0xff]
        %v639 = vld [vmem:[%s4 + $0x68] sm:$0xff]
        %v640 = vld [vmem:[%s4 + $0x70] sm:$0xff]
        %v641 = vld [vmem:[%s4 + $0x78] sm:$0xff]
        %643 = vset.pattern.permute.xlu0 0
        %644 = vperm.xlu0 %643, %v626
        %v645 = vpop.permute.xlu0 %644
        %648 = vset.pattern.permute.xlu0 0
        %649 = vperm.xlu0 %648, %v627
        %v650 = vpop.permute.xlu0 %649
        %653 = vset.pattern.permute.xlu0 0
        %654 = vperm.xlu0 %653, %v628
        %v655 = vpop.permute.xlu0 %654
        %658 = vset.pattern.permute.xlu0 0
        %659 = vperm.xlu0 %658, %v629
        %v660 = vpop.permute.xlu0 %659
        %663 = vset.pattern.permute.xlu0 0
        %664 = vperm.xlu0 %663, %v630
        %v665 = vpop.permute.xlu0 %664
        %668 = vset.pattern.permute.xlu0 0
        %669 = vperm.xlu0 %668, %v631
        %v670 = vpop.permute.xlu0 %669
        %673 = vset.pattern.permute.xlu0 0
        %674 = vperm.xlu0 %673, %v632
        %v675 = vpop.permute.xlu0 %674
        %678 = vset.pattern.permute.xlu0 0
        %679 = vperm.xlu0 %678, %v633
        %v680 = vpop.permute.xlu0 %679
        %683 = vset.pattern.permute.xlu0 0
        %684 = vperm.xlu0 %683, %v634
        %v685 = vpop.permute.xlu0 %684
        %688 = vset.pattern.permute.xlu0 0
        %689 = vperm.xlu0 %688, %v635
        %v690 = vpop.permute.xlu0 %689
        %693 = vset.pattern.permute.xlu0 0
        %694 = vperm.xlu0 %693, %v636
        %v695 = vpop.permute.xlu0 %694
        %698 = vset.pattern.permute.xlu0 0
        %699 = vperm.xlu0 %698, %v637
        %v700 = vpop.permute.xlu0 %699
        %703 = vset.pattern.permute.xlu0 0
        %704 = vperm.xlu0 %703, %v638
        %v705 = vpop.permute.xlu0 %704
        %708 = vset.pattern.permute.xlu0 0
        %709 = vperm.xlu0 %708, %v639
        %v710 = vpop.permute.xlu0 %709
        %713 = vset.pattern.permute.xlu0 0
        %714 = vperm.xlu0 %713, %v640
        %v715 = vpop.permute.xlu0 %714
        %718 = vset.pattern.permute.xlu0 0
        %719 = vperm.xlu0 %718, %v641
        %v720 = vpop.permute.xlu0 %719
        %vm722 = vcmask 523264
        %v724 = vsel %vm722, %v610, 0
        %v727 = vsel %vm722, %v611, 0
        %v730 = vsel %vm722, %v612, 0
        %v733 = vsel %vm722, %v613, 0
        %v736 = vsel %vm722, %v614, 0
        %v739 = vsel %vm722, %v615, 0
        %v742 = vsel %vm722, %v616, 0
        %v745 = vsel %vm722, %v617, 0
        %v748 = vsel %vm722, %v618, 0
        %v751 = vsel %vm722, %v619, 0
        %v754 = vsel %vm722, %v620, 0
        %v757 = vsel %vm722, %v621, 0
        %v760 = vsel %vm722, %v622, 0
        %v763 = vsel %vm722, %v623, 0
        %v766 = vsel %vm722, %v624, 0
        %v769 = vsel %vm722, %v625, 0
        %771 = vmatprep.subr.mxu0 0.0
        %772 = vmatpush1.msra.mxu0 0.0
        %773 = vmatprep.subr.mxu0 0.0
        %774 = vmatpush1.msra.mxu0 0.0
        %775 = vmatprep.subr.mxu0 0.0
        %776 = vmatpush1.msra.mxu0 0.0
        %777 = vmatprep.subr.mxu0 0.0
        %778 = vmatpush1.msra.mxu0 0.0
        %779 = vmatprep.subr.mxu0 0.0
        %780 = vmatpush1.msra.mxu0 0.0
        %781 = vmatprep.subr.mxu0 0.0
        %782 = vmatpush1.msra.mxu0 0.0
        %783 = vmatprep.subr.mxu0 0.0
        %784 = vmatpush1.msra.mxu0 0.0
        %785 = vmatprep.subr.mxu0 0.0
        %786 = vmatpush1.msra.mxu0 0.0
        %787 = vmatprep.subr.mxu0 %v609
        %788 = vmatpush1.msra.mxu0 %v608
        %789 = vmatprep.subr.mxu0 %v607
        %790 = vmatpush1.msra.mxu0 %v606
        %791 = vmatprep.subr.mxu0 %v605
        %792 = vmatpush1.msra.mxu0 %v604
        %793 = vmatprep.subr.mxu0 %v603
        %794 = vmatpush1.msra.mxu0 %v602
        %795 = vmatprep.subr.mxu0 %v601
        %796 = vmatpush1.msra.mxu0 %v600
        %797 = vmatprep.subr.mxu0 %v599
        %798 = vmatpush1.msra.mxu0 %v598
        %799 = vmatprep.subr.mxu0 %v597
        %800 = vmatpush1.msra.mxu0 %v596
        %801 = vmatprep.subr.mxu0 %v595
        %802 = vmatpush1.msra.mxu0 %v594
        %803 = vmatprep.subr.mxu0 0.0
        %804 = vmatpush2.msra.mxu0 0.0
        %805 = vmatprep.subr.mxu0 0.0
        %806 = vmatpush2.msra.mxu0 0.0
        %807 = vmatprep.subr.mxu0 0.0
        %808 = vmatpush2.msra.mxu0 0.0
        %809 = vmatprep.subr.mxu0 0.0
        %810 = vmatpush2.msra.mxu0 0.0
        %811 = vmatprep.subr.mxu0 0.0
        %812 = vmatpush2.msra.mxu0 0.0
        %813 = vmatprep.subr.mxu0 0.0
        %814 = vmatpush2.msra.mxu0 0.0
        %815 = vmatprep.subr.mxu0 0.0
        %816 = vmatpush2.msra.mxu0 0.0
        %817 = vmatprep.subr.mxu0 0.0
        %818 = vmatpush2.msra.mxu0 0.0
        %819 = vmatprep.subr.mxu0 0.0
        %820 = vmatpush2.msra.mxu0 0.0
        %821 = vmatprep.subr.mxu0 0.0
        %822 = vmatpush2.msra.mxu0 0.0
        %823 = vmatprep.subr.mxu0 0.0
        %824 = vmatpush2.msra.mxu0 0.0
        %825 = vmatprep.subr.mxu0 0.0
        %826 = vmatpush2.msra.mxu0 0.0
        %827 = vmatprep.subr.mxu0 0.0
        %828 = vmatpush2.msra.mxu0 0.0
        %829 = vmatprep.subr.mxu0 0.0
        %830 = vmatpush2.msra.mxu0 0.0
        %831 = vmatprep.subr.mxu0 0.0
        %832 = vmatpush2.msra.mxu0 0.0
        %833 = vmatprep.subr.mxu0 0.0
        %834 = vmatpush2.msra.mxu0 0.0
        %835 = vmatprep.mubr.f32.mxu0 0.0
        %836 = vmatmul.mubr.f32.gmra.mxu0 %v724
        %v837 = vpop.f32.mrf.mxu0
        %v838 = vadd.f32 %v645, %v837
        %v839 = vpop.f32.mrf.mxu0
        %v840 = vadd.f32 %v645, %v839
        %841 = vmatprep.mubr.f32.mxu0 0.0
        %842 = vmatmul.mubr.f32.gmra.mxu0 %v727
        %v843 = vpop.f32.mrf.mxu0
        %v844 = vadd.f32 %v650, %v843
        %v845 = vpop.f32.mrf.mxu0
        %v846 = vadd.f32 %v650, %v845
        %847 = vmatprep.mubr.f32.mxu0 0.0
        %848 = vmatmul.mubr.f32.gmra.mxu0 %v730
        %v849 = vpop.f32.mrf.mxu0
        %v850 = vadd.f32 %v655, %v849
        %v851 = vpop.f32.mrf.mxu0
        %v852 = vadd.f32 %v655, %v851
        %853 = vmatprep.mubr.f32.mxu0 0.0
        %854 = vmatmul.mubr.f32.gmra.mxu0 %v733
        %v855 = vpop.f32.mrf.mxu0
        %v856 = vadd.f32 %v660, %v855
        %v857 = vpop.f32.mrf.mxu0
        %v858 = vadd.f32 %v660, %v857
        %859 = vmatprep.mubr.f32.mxu0 0.0
        %860 = vmatmul.mubr.f32.gmra.mxu0 %v736
        %v861 = vpop.f32.mrf.mxu0
        %v862 = vadd.f32 %v665, %v861
        %v863 = vpop.f32.mrf.mxu0
        %v864 = vadd.f32 %v665, %v863
        %865 = vmatprep.mubr.f32.mxu0 0.0
        %866 = vmatmul.mubr.f32.gmra.mxu0 %v739
        %v867 = vpop.f32.mrf.mxu0
        %v868 = vadd.f32 %v670, %v867
        %v869 = vpop.f32.mrf.mxu0
        %v870 = vadd.f32 %v670, %v869
        %871 = vmatprep.mubr.f32.mxu0 0.0
        %872 = vmatmul.mubr.f32.gmra.mxu0 %v742
        %v873 = vpop.f32.mrf.mxu0
        %v874 = vadd.f32 %v675, %v873
        %v875 = vpop.f32.mrf.mxu0
        %v876 = vadd.f32 %v675, %v875
        %877 = vmatprep.mubr.f32.mxu0 0.0
        %878 = vmatmul.mubr.f32.gmra.mxu0 %v745
        %v879 = vpop.f32.mrf.mxu0
        %v880 = vadd.f32 %v680, %v879
        %v881 = vpop.f32.mrf.mxu0
        %v882 = vadd.f32 %v680, %v881
        %883 = vmatprep.mubr.f32.mxu0 0.0
        %884 = vmatmul.mubr.f32.gmra.mxu0 %v748
        %v885 = vpop.f32.mrf.mxu0
        %v886 = vadd.f32 %v685, %v885
        %v887 = vpop.f32.mrf.mxu0
        %v888 = vadd.f32 %v685, %v887
        %889 = vmatprep.mubr.f32.mxu0 0.0
        %890 = vmatmul.mubr.f32.gmra.mxu0 %v751
        %v891 = vpop.f32.mrf.mxu0
        %v892 = vadd.f32 %v690, %v891
        %v893 = vpop.f32.mrf.mxu0
        %v894 = vadd.f32 %v690, %v893
        %895 = vmatprep.mubr.f32.mxu0 0.0
        %896 = vmatmul.mubr.f32.gmra.mxu0 %v754
        %v897 = vpop.f32.mrf.mxu0
        %v898 = vadd.f32 %v695, %v897
        %v899 = vpop.f32.mrf.mxu0
        %v900 = vadd.f32 %v695, %v899
        %901 = vmatprep.mubr.f32.mxu0 0.0
        %902 = vmatmul.mubr.f32.gmra.mxu0 %v757
        %v903 = vpop.f32.mrf.mxu0
        %v904 = vadd.f32 %v700, %v903
        %v905 = vpop.f32.mrf.mxu0
        %v906 = vadd.f32 %v700, %v905
        %907 = vmatprep.mubr.f32.mxu0 0.0
        %908 = vmatmul.mubr.f32.gmra.mxu0 %v760
        %v909 = vpop.f32.mrf.mxu0
        %v910 = vadd.f32 %v705, %v909
        %v911 = vpop.f32.mrf.mxu0
        %v912 = vadd.f32 %v705, %v911
        %913 = vmatprep.mubr.f32.mxu0 0.0
        %914 = vmatmul.mubr.f32.gmra.mxu0 %v763
        %v915 = vpop.f32.mrf.mxu0
        %v916 = vadd.f32 %v710, %v915
        %v917 = vpop.f32.mrf.mxu0
        %v918 = vadd.f32 %v710, %v917
        %919 = vmatprep.mubr.f32.mxu0 0.0
        %920 = vmatmul.mubr.f32.gmra.mxu0 %v766
        %v921 = vpop.f32.mrf.mxu0
        %v922 = vadd.f32 %v715, %v921
        %v923 = vpop.f32.mrf.mxu0
        %v924 = vadd.f32 %v715, %v923
        %925 = vmatprep.mubr.f32.mxu0 0.0
        %926 = vmatmul.mubr.f32.gmra.mxu0 %v769
        %v927 = vpop.f32.mrf.mxu0
        %v928 = vadd.f32 %v720, %v927
        %v929 = vpop.f32.mrf.mxu0
        %v930 = vadd.f32 %v720, %v929
        %931 = vdwg.mxu0
        %v932 = vmax.f32 %v838, 0.0
        %v933 = vmax.f32 %v840, 0.0
        %v934 = vmax.f32 %v844, 0.0
        %v935 = vmax.f32 %v846, 0.0
        %v936 = vmax.f32 %v850, 0.0
        %v937 = vmax.f32 %v852, 0.0
        %v938 = vmax.f32 %v856, 0.0
        %v939 = vmax.f32 %v858, 0.0
        %v940 = vmax.f32 %v862, 0.0
        %v941 = vmax.f32 %v864, 0.0
        %v942 = vmax.f32 %v868, 0.0
        %v943 = vmax.f32 %v870, 0.0
        %v944 = vmax.f32 %v874, 0.0
        %v945 = vmax.f32 %v876, 0.0
        %v946 = vmax.f32 %v880, 0.0
        %v947 = vmax.f32 %v882, 0.0
        %v948 = vmax.f32 %v886, 0.0
        %v949 = vmax.f32 %v888, 0.0
        %v950 = vmax.f32 %v892, 0.0
        %v951 = vmax.f32 %v894, 0.0
        %v952 = vmax.f32 %v898, 0.0
        %v953 = vmax.f32 %v900, 0.0
        %v954 = vmax.f32 %v904, 0.0
        %v955 = vmax.f32 %v906, 0.0
        %v956 = vmax.f32 %v910, 0.0
        %v957 = vmax.f32 %v912, 0.0
        %v958 = vmax.f32 %v916, 0.0
        %v959 = vmax.f32 %v918, 0.0
        %v960 = vmax.f32 %v922, 0.0
        %v961 = vmax.f32 %v924, 0.0
        %v962 = vmax.f32 %v928, 0.0
        %v963 = vmax.f32 %v930, 0.0
        %v964 = vld [vmem:[%s5] sm:$0xff]
        %v965 = vld [vmem:[%s5 + $0x8] sm:$0xff]
        %v966 = vld [vmem:[%s5 + $0x10] sm:$0xff]
        %v967 = vld [vmem:[%s5 + $0x18] sm:$0xff]
        %v968 = vld [vmem:[%s5 + $0x20] sm:$0xff]
        %v969 = vld [vmem:[%s5 + $0x28] sm:$0xff]
        %v970 = vld [vmem:[%s5 + $0x30] sm:$0xff]
        %v971 = vld [vmem:[%s5 + $0x38] sm:$0xff]
        %v972 = vld [vmem:[%s5 + $0x40] sm:$0xff]
        %v973 = vld [vmem:[%s5 + $0x48] sm:$0xff]
        %v974 = vld [vmem:[%s5 + $0x50] sm:$0xff]
        %v975 = vld [vmem:[%s5 + $0x58] sm:$0xff]
        %v976 = vld [vmem:[%s5 + $0x60] sm:$0xff]
        %v977 = vld [vmem:[%s5 + $0x68] sm:$0xff]
        %v978 = vld [vmem:[%s5 + $0x70] sm:$0xff]
        %v979 = vld [vmem:[%s5 + $0x78] sm:$0xff]
        %v980 = vld [vmem:[%s5 + $0x80] sm:$0xff]
        %v981 = vld [vmem:[%s5 + $0x88] sm:$0xff]
        %v982 = vld [vmem:[%s5 + $0x90] sm:$0xff]
        %v983 = vld [vmem:[%s5 + $0x98] sm:$0xff]
        %v984 = vld [vmem:[%s5 + $0xa0] sm:$0xff]
        %v985 = vld [vmem:[%s5 + $0xa8] sm:$0xff]
        %v986 = vld [vmem:[%s5 + $0xb0] sm:$0xff]
        %v987 = vld [vmem:[%s5 + $0xb8] sm:$0xff]
        %v988 = vld [vmem:[%s5 + $0xc0] sm:$0xff]
        %v989 = vld [vmem:[%s5 + $0xc8] sm:$0xff]
        %v990 = vld [vmem:[%s5 + $0xd0] sm:$0xff]
        %v991 = vld [vmem:[%s5 + $0xd8] sm:$0xff]
        %v992 = vld [vmem:[%s5 + $0xe0] sm:$0xff]
        %v993 = vld [vmem:[%s5 + $0xe8] sm:$0xff]
        %v994 = vld [vmem:[%s5 + $0xf0] sm:$0xff]
        %v995 = vld [vmem:[%s5 + $0xf8] sm:$0xff]
        %v996 = vld [vmem:[%s6] sm:$0xff]
        %v997 = vld [vmem:[%s6 + $0x8] sm:$0xff]
        %v998 = vld [vmem:[%s6 + $0x10] sm:$0xff]
        %v999 = vld [vmem:[%s6 + $0x18] sm:$0xff]
        %v1000 = vld [vmem:[%s6 + $0x20] sm:$0xff]
        %v1001 = vld [vmem:[%s6 + $0x28] sm:$0xff]
        %v1002 = vld [vmem:[%s6 + $0x30] sm:$0xff]
        %v1003 = vld [vmem:[%s6 + $0x38] sm:$0xff]
        %v1004 = vld [vmem:[%s6 + $0x40] sm:$0xff]
        %v1005 = vld [vmem:[%s6 + $0x48] sm:$0xff]
        %v1006 = vld [vmem:[%s6 + $0x50] sm:$0xff]
        %v1007 = vld [vmem:[%s6 + $0x58] sm:$0xff]
        %v1008 = vld [vmem:[%s6 + $0x60] sm:$0xff]
        %v1009 = vld [vmem:[%s6 + $0x68] sm:$0xff]
        %v1010 = vld [vmem:[%s6 + $0x70] sm:$0xff]
        %v1011 = vld [vmem:[%s6 + $0x78] sm:$0xff]
        %v1012 = vld [vmem:[%s6 + $0x80] sm:$0xff]
        %v1013 = vld [vmem:[%s6 + $0x88] sm:$0xff]
        %v1014 = vld [vmem:[%s6 + $0x90] sm:$0xff]
        %v1015 = vld [vmem:[%s6 + $0x98] sm:$0xff]
        %v1016 = vld [vmem:[%s6 + $0xa0] sm:$0xff]
        %v1017 = vld [vmem:[%s6 + $0xa8] sm:$0xff]
        %v1018 = vld [vmem:[%s6 + $0xb0] sm:$0xff]
        %v1019 = vld [vmem:[%s6 + $0xb8] sm:$0xff]
        %v1020 = vld [vmem:[%s6 + $0xc0] sm:$0xff]
        %v1021 = vld [vmem:[%s6 + $0xc8] sm:$0xff]
        %v1022 = vld [vmem:[%s6 + $0xd0] sm:$0xff]
        %v1023 = vld [vmem:[%s6 + $0xd8] sm:$0xff]
        %v1024 = vld [vmem:[%s6 + $0xe0] sm:$0xff]
        %v1025 = vld [vmem:[%s6 + $0xe8] sm:$0xff]
        %v1026 = vld [vmem:[%s6 + $0xf0] sm:$0xff]
        %v1027 = vld [vmem:[%s6 + $0xf8] sm:$0xff]
        %1029 = vset.pattern.permute.xlu0 0
        %1030 = vperm.xlu0 %1029, %v996
        %v1031 = vpop.permute.xlu0 %1030
        %1034 = vset.pattern.permute.xlu0 0
        %1035 = vperm.xlu0 %1034, %v997
        %v1036 = vpop.permute.xlu0 %1035
        %1039 = vset.pattern.permute.xlu0 0
        %1040 = vperm.xlu0 %1039, %v998
        %v1041 = vpop.permute.xlu0 %1040
        %1044 = vset.pattern.permute.xlu0 0
        %1045 = vperm.xlu0 %1044, %v999
        %v1046 = vpop.permute.xlu0 %1045
        %1049 = vset.pattern.permute.xlu0 0
        %1050 = vperm.xlu0 %1049, %v1000
        %v1051 = vpop.permute.xlu0 %1050
        %1054 = vset.pattern.permute.xlu0 0
        %1055 = vperm.xlu0 %1054, %v1001
        %v1056 = vpop.permute.xlu0 %1055
        %1059 = vset.pattern.permute.xlu0 0
        %1060 = vperm.xlu0 %1059, %v1002
        %v1061 = vpop.permute.xlu0 %1060
        %1064 = vset.pattern.permute.xlu0 0
        %1065 = vperm.xlu0 %1064, %v1003
        %v1066 = vpop.permute.xlu0 %1065
        %1069 = vset.pattern.permute.xlu0 0
        %1070 = vperm.xlu0 %1069, %v1004
        %v1071 = vpop.permute.xlu0 %1070
        %1074 = vset.pattern.permute.xlu0 0
        %1075 = vperm.xlu0 %1074, %v1005
        %v1076 = vpop.permute.xlu0 %1075
        %1079 = vset.pattern.permute.xlu0 0
        %1080 = vperm.xlu0 %1079, %v1006
        %v1081 = vpop.permute.xlu0 %1080
        %1084 = vset.pattern.permute.xlu0 0
        %1085 = vperm.xlu0 %1084, %v1007
        %v1086 = vpop.permute.xlu0 %1085
        %1089 = vset.pattern.permute.xlu0 0
        %1090 = vperm.xlu0 %1089, %v1008
        %v1091 = vpop.permute.xlu0 %1090
        %1094 = vset.pattern.permute.xlu0 0
        %1095 = vperm.xlu0 %1094, %v1009
        %v1096 = vpop.permute.xlu0 %1095
        %1099 = vset.pattern.permute.xlu0 0
        %1100 = vperm.xlu0 %1099, %v1010
        %v1101 = vpop.permute.xlu0 %1100
        %1104 = vset.pattern.permute.xlu0 0
        %1105 = vperm.xlu0 %1104, %v1011
        %v1106 = vpop.permute.xlu0 %1105
        %1109 = vset.pattern.permute.xlu0 0
        %1110 = vperm.xlu0 %1109, %v1012
        %v1111 = vpop.permute.xlu0 %1110
        %1114 = vset.pattern.permute.xlu0 0
        %1115 = vperm.xlu0 %1114, %v1013
        %v1116 = vpop.permute.xlu0 %1115
        %1119 = vset.pattern.permute.xlu0 0
        %1120 = vperm.xlu0 %1119, %v1014
        %v1121 = vpop.permute.xlu0 %1120
        %1124 = vset.pattern.permute.xlu0 0
        %1125 = vperm.xlu0 %1124, %v1015
        %v1126 = vpop.permute.xlu0 %1125
        %1129 = vset.pattern.permute.xlu0 0
        %1130 = vperm.xlu0 %1129, %v1016
        %v1131 = vpop.permute.xlu0 %1130
        %1134 = vset.pattern.permute.xlu0 0
        %1135 = vperm.xlu0 %1134, %v1017
        %v1136 = vpop.permute.xlu0 %1135
        %1139 = vset.pattern.permute.xlu0 0
        %1140 = vperm.xlu0 %1139, %v1018
        %v1141 = vpop.permute.xlu0 %1140
        %1144 = vset.pattern.permute.xlu0 0
        %1145 = vperm.xlu0 %1144, %v1019
        %v1146 = vpop.permute.xlu0 %1145
        %1149 = vset.pattern.permute.xlu0 0
        %1150 = vperm.xlu0 %1149, %v1020
        %v1151 = vpop.permute.xlu0 %1150
        %1154 = vset.pattern.permute.xlu0 0
        %1155 = vperm.xlu0 %1154, %v1021
        %v1156 = vpop.permute.xlu0 %1155
        %1159 = vset.pattern.permute.xlu0 0
        %1160 = vperm.xlu0 %1159, %v1022
        %v1161 = vpop.permute.xlu0 %1160
        %1164 = vset.pattern.permute.xlu0 0
        %1165 = vperm.xlu0 %1164, %v1023
        %v1166 = vpop.permute.xlu0 %1165
        %1169 = vset.pattern.permute.xlu0 0
        %1170 = vperm.xlu0 %1169, %v1024
        %v1171 = vpop.permute.xlu0 %1170
        %1174 = vset.pattern.permute.xlu0 0
        %1175 = vperm.xlu0 %1174, %v1025
        %v1176 = vpop.permute.xlu0 %1175
        %1179 = vset.pattern.permute.xlu0 0
        %1180 = vperm.xlu0 %1179, %v1026
        %v1181 = vpop.permute.xlu0 %1180
        %1184 = vset.pattern.permute.xlu0 0
        %1185 = vperm.xlu0 %1184, %v1027
        %v1186 = vpop.permute.xlu0 %1185
        %1188 = vmatprep.subr.mxu0 %v963
        %1189 = vmatpush1.msra.mxu0 %v962
        %1190 = vmatprep.subr.mxu0 %v961
        %1191 = vmatpush1.msra.mxu0 %v960
        %1192 = vmatprep.subr.mxu0 %v959
        %1193 = vmatpush1.msra.mxu0 %v958
        %1194 = vmatprep.subr.mxu0 %v957
        %1195 = vmatpush1.msra.mxu0 %v956
        %1196 = vmatprep.subr.mxu0 %v955
        %1197 = vmatpush1.msra.mxu0 %v954
        %1198 = vmatprep.subr.mxu0 %v953
        %1199 = vmatpush1.msra.mxu0 %v952
        %1200 = vmatprep.subr.mxu0 %v951
        %1201 = vmatpush1.msra.mxu0 %v950
        %1202 = vmatprep.subr.mxu0 %v949
        %1203 = vmatpush1.msra.mxu0 %v948
        %1204 = vmatprep.subr.mxu0 %v947
        %1205 = vmatpush1.msra.mxu0 %v946
        %1206 = vmatprep.subr.mxu0 %v945
        %1207 = vmatpush1.msra.mxu0 %v944
        %1208 = vmatprep.subr.mxu0 %v943
        %1209 = vmatpush1.msra.mxu0 %v942
        %1210 = vmatprep.subr.mxu0 %v941
        %1211 = vmatpush1.msra.mxu0 %v940
        %1212 = vmatprep.subr.mxu0 %v939
        %1213 = vmatpush1.msra.mxu0 %v938
        %1214 = vmatprep.subr.mxu0 %v937
        %1215 = vmatpush1.msra.mxu0 %v936
        %1216 = vmatprep.subr.mxu0 %v935
        %1217 = vmatpush1.msra.mxu0 %v934
        %1218 = vmatprep.subr.mxu0 %v933
        %1219 = vmatpush1.msra.mxu0 %v932
        %1220 = vmatprep.subr.mxu0 0.0
        %1221 = vmatpush2.msra.mxu0 0.0
        %1222 = vmatprep.subr.mxu0 0.0
        %1223 = vmatpush2.msra.mxu0 0.0
        %1224 = vmatprep.subr.mxu0 0.0
        %1225 = vmatpush2.msra.mxu0 0.0
        %1226 = vmatprep.subr.mxu0 0.0
        %1227 = vmatpush2.msra.mxu0 0.0
        %1228 = vmatprep.subr.mxu0 0.0
        %1229 = vmatpush2.msra.mxu0 0.0
        %1230 = vmatprep.subr.mxu0 0.0
        %1231 = vmatpush2.msra.mxu0 0.0
        %1232 = vmatprep.subr.mxu0 0.0
        %1233 = vmatpush2.msra.mxu0 0.0
        %1234 = vmatprep.subr.mxu0 0.0
        %1235 = vmatpush2.msra.mxu0 0.0
        %1236 = vmatprep.subr.mxu0 0.0
        %1237 = vmatpush2.msra.mxu0 0.0
        %1238 = vmatprep.subr.mxu0 0.0
        %1239 = vmatpush2.msra.mxu0 0.0
        %1240 = vmatprep.subr.mxu0 0.0
        %1241 = vmatpush2.msra.mxu0 0.0
        %1242 = vmatprep.subr.mxu0 0.0
        %1243 = vmatpush2.msra.mxu0 0.0
        %1244 = vmatprep.subr.mxu0 0.0
        %1245 = vmatpush2.msra.mxu0 0.0
        %1246 = vmatprep.subr.mxu0 0.0
        %1247 = vmatpush2.msra.mxu0 0.0
        %1248 = vmatprep.subr.mxu0 0.0
        %1249 = vmatpush2.msra.mxu0 0.0
        %1250 = vmatprep.subr.mxu0 0.0
        %1251 = vmatpush2.msra.mxu0 0.0
        %1252 = vmatprep.mubr.f32.mxu0 0.0
        %1253 = vmatmul.mubr.f32.gmra.mxu0 %v964
        %v1254 = vpop.f32.mrf.mxu0
        %v1255 = vadd.f32 %v1031, %v1254
        %v1256 = vpop.f32.mrf.mxu0
        %v1257 = vadd.f32 %v1031, %v1256
        %1258 = vmatprep.mubr.f32.mxu0 0.0
        %1259 = vmatmul.mubr.f32.gmra.mxu0 %v965
        %v1260 = vpop.f32.mrf.mxu0
        %v1261 = vadd.f32 %v1036, %v1260
        %v1262 = vpop.f32.mrf.mxu0
        %v1263 = vadd.f32 %v1036, %v1262
        %1264 = vmatprep.mubr.f32.mxu0 0.0
        %1265 = vmatmul.mubr.f32.gmra.mxu0 %v966
        %v1266 = vpop.f32.mrf.mxu0
        %v1267 = vadd.f32 %v1041, %v1266
        %v1268 = vpop.f32.mrf.mxu0
        %v1269 = vadd.f32 %v1041, %v1268
        %1270 = vmatprep.mubr.f32.mxu0 0.0
        %1271 = vmatmul.mubr.f32.gmra.mxu0 %v967
        %v1272 = vpop.f32.mrf.mxu0
        %v1273 = vadd.f32 %v1046, %v1272
        %v1274 = vpop.f32.mrf.mxu0
        %v1275 = vadd.f32 %v1046, %v1274
        %1276 = vmatprep.mubr.f32.mxu0 0.0
        %1277 = vmatmul.mubr.f32.gmra.mxu0 %v968
        %v1278 = vpop.f32.mrf.mxu0
        %v1279 = vadd.f32 %v1051, %v1278
        %v1280 = vpop.f32.mrf.mxu0
        %v1281 = vadd.f32 %v1051, %v1280
        %1282 = vmatprep.mubr.f32.mxu0 0.0
        %1283 = vmatmul.mubr.f32.gmra.mxu0 %v969
        %v1284 = vpop.f32.mrf.mxu0
        %v1285 = vadd.f32 %v1056, %v1284
        %v1286 = vpop.f32.mrf.mxu0
        %v1287 = vadd.f32 %v1056, %v1286
        %1288 = vmatprep.mubr.f32.mxu0 0.0
        %1289 = vmatmul.mubr.f32.gmra.mxu0 %v970
        %v1290 = vpop.f32.mrf.mxu0
        %v1291 = vadd.f32 %v1061, %v1290
        %v1292 = vpop.f32.mrf.mxu0
        %v1293 = vadd.f32 %v1061, %v1292
        %1294 = vmatprep.mubr.f32.mxu0 0.0
        %1295 = vmatmul.mubr.f32.gmra.mxu0 %v971
        %v1296 = vpop.f32.mrf.mxu0
        %v1297 = vadd.f32 %v1066, %v1296
        %v1298 = vpop.f32.mrf.mxu0
        %v1299 = vadd.f32 %v1066, %v1298
        %1300 = vmatprep.mubr.f32.mxu0 0.0
        %1301 = vmatmul.mubr.f32.gmra.mxu0 %v972
        %v1302 = vpop.f32.mrf.mxu0
        %v1303 = vadd.f32 %v1071, %v1302
        %v1304 = vpop.f32.mrf.mxu0
        %v1305 = vadd.f32 %v1071, %v1304
        %1306 = vmatprep.mubr.f32.mxu0 0.0
        %1307 = vmatmul.mubr.f32.gmra.mxu0 %v973
        %v1308 = vpop.f32.mrf.mxu0
        %v1309 = vadd.f32 %v1076, %v1308
        %v1310 = vpop.f32.mrf.mxu0
        %v1311 = vadd.f32 %v1076, %v1310
        %1312 = vmatprep.mubr.f32.mxu0 0.0
        %1313 = vmatmul.mubr.f32.gmra.mxu0 %v974
        %v1314 = vpop.f32.mrf.mxu0
        %v1315 = vadd.f32 %v1081, %v1314
        %v1316 = vpop.f32.mrf.mxu0
        %v1317 = vadd.f32 %v1081, %v1316
        %1318 = vmatprep.mubr.f32.mxu0 0.0
        %1319 = vmatmul.mubr.f32.gmra.mxu0 %v975
        %v1320 = vpop.f32.mrf.mxu0
        %v1321 = vadd.f32 %v1086, %v1320
        %v1322 = vpop.f32.mrf.mxu0
        %v1323 = vadd.f32 %v1086, %v1322
        %1324 = vmatprep.mubr.f32.mxu0 0.0
        %1325 = vmatmul.mubr.f32.gmra.mxu0 %v976
        %v1326 = vpop.f32.mrf.mxu0
        %v1327 = vadd.f32 %v1091, %v1326
        %v1328 = vpop.f32.mrf.mxu0
        %v1329 = vadd.f32 %v1091, %v1328
        %1330 = vmatprep.mubr.f32.mxu0 0.0
        %1331 = vmatmul.mubr.f32.gmra.mxu0 %v977
        %v1332 = vpop.f32.mrf.mxu0
        %v1333 = vadd.f32 %v1096, %v1332
        %v1334 = vpop.f32.mrf.mxu0
        %v1335 = vadd.f32 %v1096, %v1334
        %1336 = vmatprep.mubr.f32.mxu0 0.0
        %1337 = vmatmul.mubr.f32.gmra.mxu0 %v978
        %v1338 = vpop.f32.mrf.mxu0
        %v1339 = vadd.f32 %v1101, %v1338
        %v1340 = vpop.f32.mrf.mxu0
        %v1341 = vadd.f32 %v1101, %v1340
        %1342 = vmatprep.mubr.f32.mxu0 0.0
        %1343 = vmatmul.mubr.f32.gmra.mxu0 %v979
        %v1344 = vpop.f32.mrf.mxu0
        %v1345 = vadd.f32 %v1106, %v1344
        %v1346 = vpop.f32.mrf.mxu0
        %v1347 = vadd.f32 %v1106, %v1346
        %1348 = vmatprep.mubr.f32.mxu0 0.0
        %1349 = vmatmul.mubr.f32.gmra.mxu0 %v980
        %v1350 = vpop.f32.mrf.mxu0
        %v1351 = vadd.f32 %v1111, %v1350
        %v1352 = vpop.f32.mrf.mxu0
        %v1353 = vadd.f32 %v1111, %v1352
        %1354 = vmatprep.mubr.f32.mxu0 0.0
        %1355 = vmatmul.mubr.f32.gmra.mxu0 %v981
        %v1356 = vpop.f32.mrf.mxu0
        %v1357 = vadd.f32 %v1116, %v1356
        %v1358 = vpop.f32.mrf.mxu0
        %v1359 = vadd.f32 %v1116, %v1358
        %1360 = vmatprep.mubr.f32.mxu0 0.0
        %1361 = vmatmul.mubr.f32.gmra.mxu0 %v982
        %v1362 = vpop.f32.mrf.mxu0
        %v1363 = vadd.f32 %v1121, %v1362
        %v1364 = vpop.f32.mrf.mxu0
        %v1365 = vadd.f32 %v1121, %v1364
        %1366 = vmatprep.mubr.f32.mxu0 0.0
        %1367 = vmatmul.mubr.f32.gmra.mxu0 %v983
        %v1368 = vpop.f32.mrf.mxu0
        %v1369 = vadd.f32 %v1126, %v1368
        %v1370 = vpop.f32.mrf.mxu0
        %v1371 = vadd.f32 %v1126, %v1370
        %1372 = vmatprep.mubr.f32.mxu0 0.0
        %1373 = vmatmul.mubr.f32.gmra.mxu0 %v984
        %v1374 = vpop.f32.mrf.mxu0
        %v1375 = vadd.f32 %v1131, %v1374
        %v1376 = vpop.f32.mrf.mxu0
        %v1377 = vadd.f32 %v1131, %v1376
        %1378 = vmatprep.mubr.f32.mxu0 0.0
        %1379 = vmatmul.mubr.f32.gmra.mxu0 %v985
        %v1380 = vpop.f32.mrf.mxu0
        %v1381 = vadd.f32 %v1136, %v1380
        %v1382 = vpop.f32.mrf.mxu0
        %v1383 = vadd.f32 %v1136, %v1382
        %1384 = vmatprep.mubr.f32.mxu0 0.0
        %1385 = vmatmul.mubr.f32.gmra.mxu0 %v986
        %v1386 = vpop.f32.mrf.mxu0
        %v1387 = vadd.f32 %v1141, %v1386
        %v1388 = vpop.f32.mrf.mxu0
        %v1389 = vadd.f32 %v1141, %v1388
        %1390 = vmatprep.mubr.f32.mxu0 0.0
        %1391 = vmatmul.mubr.f32.gmra.mxu0 %v987
        %v1392 = vpop.f32.mrf.mxu0
        %v1393 = vadd.f32 %v1146, %v1392
        %v1394 = vpop.f32.mrf.mxu0
        %v1395 = vadd.f32 %v1146, %v1394
        %1396 = vmatprep.mubr.f32.mxu0 0.0
        %1397 = vmatmul.mubr.f32.gmra.mxu0 %v988
        %v1398 = vpop.f32.mrf.mxu0
        %v1399 = vadd.f32 %v1151, %v1398
        %v1400 = vpop.f32.mrf.mxu0
        %v1401 = vadd.f32 %v1151, %v1400
        %1402 = vmatprep.mubr.f32.mxu0 0.0
        %1403 = vmatmul.mubr.f32.gmra.mxu0 %v989
        %v1404 = vpop.f32.mrf.mxu0
        %v1405 = vadd.f32 %v1156, %v1404
        %v1406 = vpop.f32.mrf.mxu0
        %v1407 = vadd.f32 %v1156, %v1406
        %1408 = vmatprep.mubr.f32.mxu0 0.0
        %1409 = vmatmul.mubr.f32.gmra.mxu0 %v990
        %v1410 = vpop.f32.mrf.mxu0
        %v1411 = vadd.f32 %v1161, %v1410
        %v1412 = vpop.f32.mrf.mxu0
        %v1413 = vadd.f32 %v1161, %v1412
        %1414 = vmatprep.mubr.f32.mxu0 0.0
        %1415 = vmatmul.mubr.f32.gmra.mxu0 %v991
        %v1416 = vpop.f32.mrf.mxu0
        %v1417 = vadd.f32 %v1166, %v1416
        %v1418 = vpop.f32.mrf.mxu0
        %v1419 = vadd.f32 %v1166, %v1418
        %1420 = vmatprep.mubr.f32.mxu0 0.0
        %1421 = vmatmul.mubr.f32.gmra.mxu0 %v992
        %v1422 = vpop.f32.mrf.mxu0
        %v1423 = vadd.f32 %v1171, %v1422
        %v1424 = vpop.f32.mrf.mxu0
        %v1425 = vadd.f32 %v1171, %v1424
        %1426 = vmatprep.mubr.f32.mxu0 0.0
        %1427 = vmatmul.mubr.f32.gmra.mxu0 %v993
        %v1428 = vpop.f32.mrf.mxu0
        %v1429 = vadd.f32 %v1176, %v1428
        %v1430 = vpop.f32.mrf.mxu0
        %v1431 = vadd.f32 %v1176, %v1430
        %1432 = vmatprep.mubr.f32.mxu0 0.0
        %1433 = vmatmul.mubr.f32.gmra.mxu0 %v994
        %v1434 = vpop.f32.mrf.mxu0
        %v1435 = vadd.f32 %v1181, %v1434
        %v1436 = vpop.f32.mrf.mxu0
        %v1437 = vadd.f32 %v1181, %v1436
        %1438 = vmatprep.mubr.f32.mxu0 0.0
        %1439 = vmatmul.mubr.f32.gmra.mxu0 %v995
        %v1440 = vpop.f32.mrf.mxu0
        %v1441 = vadd.f32 %v1186, %v1440
        %v1442 = vpop.f32.mrf.mxu0
        %v1443 = vadd.f32 %v1186, %v1442
        %1444 = vdwg.mxu0
        %v1445 = vld [vmem:[%s7] sm:$0xff]
        %v1446 = vld [vmem:[%s7 + $0x8] sm:$0xff]
        %v1447 = vld [vmem:[%s7 + $0x10] sm:$0xff]
        %v1448 = vld [vmem:[%s7 + $0x18] sm:$0xff]
        %v1449 = vld [vmem:[%s7 + $0x20] sm:$0xff]
        %v1450 = vld [vmem:[%s7 + $0x28] sm:$0xff]
        %v1451 = vld [vmem:[%s7 + $0x30] sm:$0xff]
        %v1452 = vld [vmem:[%s7 + $0x38] sm:$0xff]
        %v1453 = vld [vmem:[%s7 + $0x40] sm:$0xff]
        %v1454 = vld [vmem:[%s7 + $0x48] sm:$0xff]
        %v1455 = vld [vmem:[%s7 + $0x50] sm:$0xff]
        %v1456 = vld [vmem:[%s7 + $0x58] sm:$0xff]
        %v1457 = vld [vmem:[%s7 + $0x60] sm:$0xff]
        %v1458 = vld [vmem:[%s7 + $0x68] sm:$0xff]
        %v1459 = vld [vmem:[%s7 + $0x70] sm:$0xff]
        %v1460 = vld [vmem:[%s7 + $0x78] sm:$0xff]
        %v1461 = vld [vmem:[%s7 + $0x80] sm:$0xff]
        %v1462 = vld [vmem:[%s7 + $0x88] sm:$0xff]
        %v1463 = vld [vmem:[%s7 + $0x90] sm:$0xff]
        %v1464 = vld [vmem:[%s7 + $0x98] sm:$0xff]
        %v1465 = vld [vmem:[%s7 + $0xa0] sm:$0xff]
        %v1466 = vld [vmem:[%s7 + $0xa8] sm:$0xff]
        %v1467 = vld [vmem:[%s7 + $0xb0] sm:$0xff]
        %v1468 = vld [vmem:[%s7 + $0xb8] sm:$0xff]
        %v1469 = vld [vmem:[%s7 + $0xc0] sm:$0xff]
        %v1470 = vld [vmem:[%s7 + $0xc8] sm:$0xff]
        %v1471 = vld [vmem:[%s7 + $0xd0] sm:$0xff]
        %v1472 = vld [vmem:[%s7 + $0xd8] sm:$0xff]
        %v1473 = vld [vmem:[%s7 + $0xe0] sm:$0xff]
        %v1474 = vld [vmem:[%s7 + $0xe8] sm:$0xff]
        %v1475 = vld [vmem:[%s7 + $0xf0] sm:$0xff]
        %v1476 = vld [vmem:[%s7 + $0xf8] sm:$0xff]
        %1478 = vset.pattern.permute.xlu0 0
        %1479 = vperm.xlu0 %1478, %v1445
        %v1480 = vpop.permute.xlu0 %1479
        %1483 = vset.pattern.permute.xlu0 0
        %1484 = vperm.xlu0 %1483, %v1446
        %v1485 = vpop.permute.xlu0 %1484
        %1488 = vset.pattern.permute.xlu0 0
        %1489 = vperm.xlu0 %1488, %v1447
        %v1490 = vpop.permute.xlu0 %1489
        %1493 = vset.pattern.permute.xlu0 0
        %1494 = vperm.xlu0 %1493, %v1448
        %v1495 = vpop.permute.xlu0 %1494
        %1498 = vset.pattern.permute.xlu0 0
        %1499 = vperm.xlu0 %1498, %v1449
        %v1500 = vpop.permute.xlu0 %1499
        %1503 = vset.pattern.permute.xlu0 0
        %1504 = vperm.xlu0 %1503, %v1450
        %v1505 = vpop.permute.xlu0 %1504
        %1508 = vset.pattern.permute.xlu0 0
        %1509 = vperm.xlu0 %1508, %v1451
        %v1510 = vpop.permute.xlu0 %1509
        %1513 = vset.pattern.permute.xlu0 0
        %1514 = vperm.xlu0 %1513, %v1452
        %v1515 = vpop.permute.xlu0 %1514
        %1518 = vset.pattern.permute.xlu0 0
        %1519 = vperm.xlu0 %1518, %v1453
        %v1520 = vpop.permute.xlu0 %1519
        %1523 = vset.pattern.permute.xlu0 0
        %1524 = vperm.xlu0 %1523, %v1454
        %v1525 = vpop.permute.xlu0 %1524
        %1528 = vset.pattern.permute.xlu0 0
        %1529 = vperm.xlu0 %1528, %v1455
        %v1530 = vpop.permute.xlu0 %1529
        %1533 = vset.pattern.permute.xlu0 0
        %1534 = vperm.xlu0 %1533, %v1456
        %v1535 = vpop.permute.xlu0 %1534
        %1538 = vset.pattern.permute.xlu0 0
        %1539 = vperm.xlu0 %1538, %v1457
        %v1540 = vpop.permute.xlu0 %1539
        %1543 = vset.pattern.permute.xlu0 0
        %1544 = vperm.xlu0 %1543, %v1458
        %v1545 = vpop.permute.xlu0 %1544
        %1548 = vset.pattern.permute.xlu0 0
        %1549 = vperm.xlu0 %1548, %v1459
        %v1550 = vpop.permute.xlu0 %1549
        %1553 = vset.pattern.permute.xlu0 0
        %1554 = vperm.xlu0 %1553, %v1460
        %v1555 = vpop.permute.xlu0 %1554
        %1558 = vset.pattern.permute.xlu0 0
        %1559 = vperm.xlu0 %1558, %v1461
        %v1560 = vpop.permute.xlu0 %1559
        %1563 = vset.pattern.permute.xlu0 0
        %1564 = vperm.xlu0 %1563, %v1462
        %v1565 = vpop.permute.xlu0 %1564
        %1568 = vset.pattern.permute.xlu0 0
        %1569 = vperm.xlu0 %1568, %v1463
        %v1570 = vpop.permute.xlu0 %1569
        %1573 = vset.pattern.permute.xlu0 0
        %1574 = vperm.xlu0 %1573, %v1464
        %v1575 = vpop.permute.xlu0 %1574
        %1578 = vset.pattern.permute.xlu0 0
        %1579 = vperm.xlu0 %1578, %v1465
        %v1580 = vpop.permute.xlu0 %1579
        %1583 = vset.pattern.permute.xlu0 0
        %1584 = vperm.xlu0 %1583, %v1466
        %v1585 = vpop.permute.xlu0 %1584
        %1588 = vset.pattern.permute.xlu0 0
        %1589 = vperm.xlu0 %1588, %v1467
        %v1590 = vpop.permute.xlu0 %1589
        %1593 = vset.pattern.permute.xlu0 0
        %1594 = vperm.xlu0 %1593, %v1468
        %v1595 = vpop.permute.xlu0 %1594
        %1598 = vset.pattern.permute.xlu0 0
        %1599 = vperm.xlu0 %1598, %v1469
        %v1600 = vpop.permute.xlu0 %1599
        %1603 = vset.pattern.permute.xlu0 0
        %1604 = vperm.xlu0 %1603, %v1470
        %v1605 = vpop.permute.xlu0 %1604
        %1608 = vset.pattern.permute.xlu0 0
        %1609 = vperm.xlu0 %1608, %v1471
        %v1610 = vpop.permute.xlu0 %1609
        %1613 = vset.pattern.permute.xlu0 0
        %1614 = vperm.xlu0 %1613, %v1472
        %v1615 = vpop.permute.xlu0 %1614
        %1618 = vset.pattern.permute.xlu0 0
        %1619 = vperm.xlu0 %1618, %v1473
        %v1620 = vpop.permute.xlu0 %1619
        %1623 = vset.pattern.permute.xlu0 0
        %1624 = vperm.xlu0 %1623, %v1474
        %v1625 = vpop.permute.xlu0 %1624
        %1628 = vset.pattern.permute.xlu0 0
        %1629 = vperm.xlu0 %1628, %v1475
        %v1630 = vpop.permute.xlu0 %1629
        %1633 = vset.pattern.permute.xlu0 0
        %1634 = vperm.xlu0 %1633, %v1476
        %v1635 = vpop.permute.xlu0 %1634
        %v1637 = vmul.f32 %v1255, %v1480
        %v1638 = vmul.f32 %v1257, %v1480
        %v1639 = vmul.f32 %v1261, %v1485
        %v1640 = vmul.f32 %v1263, %v1485
        %v1641 = vmul.f32 %v1267, %v1490
        %v1642 = vmul.f32 %v1269, %v1490
        %v1643 = vmul.f32 %v1273, %v1495
        %v1644 = vmul.f32 %v1275, %v1495
        %v1645 = vmul.f32 %v1279, %v1500
        %v1646 = vmul.f32 %v1281, %v1500
        %v1647 = vmul.f32 %v1285, %v1505
        %v1648 = vmul.f32 %v1287, %v1505
        %v1649 = vmul.f32 %v1291, %v1510
        %v1650 = vmul.f32 %v1293, %v1510
        %v1651 = vmul.f32 %v1297, %v1515
        %v1652 = vmul.f32 %v1299, %v1515
        %v1653 = vmul.f32 %v1303, %v1520
        %v1654 = vmul.f32 %v1305, %v1520
        %v1655 = vmul.f32 %v1309, %v1525
        %v1656 = vmul.f32 %v1311, %v1525
        %v1657 = vmul.f32 %v1315, %v1530
        %v1658 = vmul.f32 %v1317, %v1530
        %v1659 = vmul.f32 %v1321, %v1535
        %v1660 = vmul.f32 %v1323, %v1535
        %v1661 = vmul.f32 %v1327, %v1540
        %v1662 = vmul.f32 %v1329, %v1540
        %v1663 = vmul.f32 %v1333, %v1545
        %v1664 = vmul.f32 %v1335, %v1545
        %v1665 = vmul.f32 %v1339, %v1550
        %v1666 = vmul.f32 %v1341, %v1550
        %v1667 = vmul.f32 %v1345, %v1555
        %v1668 = vmul.f32 %v1347, %v1555
        %v1669 = vmul.f32 %v1351, %v1560
        %v1670 = vmul.f32 %v1353, %v1560
        %v1671 = vmul.f32 %v1357, %v1565
        %v1672 = vmul.f32 %v1359, %v1565
        %v1673 = vmul.f32 %v1363, %v1570
        %v1674 = vmul.f32 %v1365, %v1570
        %v1675 = vmul.f32 %v1369, %v1575
        %v1676 = vmul.f32 %v1371, %v1575
        %v1677 = vmul.f32 %v1375, %v1580
        %v1678 = vmul.f32 %v1377, %v1580
        %v1679 = vmul.f32 %v1381, %v1585
        %v1680 = vmul.f32 %v1383, %v1585
        %v1681 = vmul.f32 %v1387, %v1590
        %v1682 = vmul.f32 %v1389, %v1590
        %v1683 = vmul.f32 %v1393, %v1595
        %v1684 = vmul.f32 %v1395, %v1595
        %v1685 = vmul.f32 %v1399, %v1600
        %v1686 = vmul.f32 %v1401, %v1600
        %v1687 = vmul.f32 %v1405, %v1605
        %v1688 = vmul.f32 %v1407, %v1605
        %v1689 = vmul.f32 %v1411, %v1610
        %v1690 = vmul.f32 %v1413, %v1610
        %v1691 = vmul.f32 %v1417, %v1615
        %v1692 = vmul.f32 %v1419, %v1615
        %v1693 = vmul.f32 %v1423, %v1620
        %v1694 = vmul.f32 %v1425, %v1620
        %v1695 = vmul.f32 %v1429, %v1625
        %v1696 = vmul.f32 %v1431, %v1625
        %v1697 = vmul.f32 %v1435, %v1630
        %v1698 = vmul.f32 %v1437, %v1630
        %v1699 = vmul.f32 %v1441, %v1635
        %v1700 = vmul.f32 %v1443, %v1635
        %v1701 = vadd.f32 %v1637, %v1639
        %v1702 = vadd.f32 %v1701, %v1641
        %v1703 = vadd.f32 %v1702, %v1643
        %v1704 = vadd.f32 %v1703, %v1645
        %v1705 = vadd.f32 %v1704, %v1647
        %v1706 = vadd.f32 %v1705, %v1649
        %v1707 = vadd.f32 %v1706, %v1651
        %v1708 = vadd.f32 %v1707, %v1653
        %v1709 = vadd.f32 %v1708, %v1655
        %v1710 = vadd.f32 %v1709, %v1657
        %v1711 = vadd.f32 %v1710, %v1659
        %v1712 = vadd.f32 %v1711, %v1661
        %v1713 = vadd.f32 %v1712, %v1663
        %v1714 = vadd.f32 %v1713, %v1665
        %v1715 = vadd.f32 %v1714, %v1667
        %v1716 = vadd.f32 %v1715, %v1669
        %v1717 = vadd.f32 %v1716, %v1671
        %v1718 = vadd.f32 %v1717, %v1673
        %v1719 = vadd.f32 %v1718, %v1675
        %v1720 = vadd.f32 %v1719, %v1677
        %v1721 = vadd.f32 %v1720, %v1679
        %v1722 = vadd.f32 %v1721, %v1681
        %v1723 = vadd.f32 %v1722, %v1683
        %v1724 = vadd.f32 %v1723, %v1685
        %v1725 = vadd.f32 %v1724, %v1687
        %v1726 = vadd.f32 %v1725, %v1689
        %v1727 = vadd.f32 %v1726, %v1691
        %v1728 = vadd.f32 %v1727, %v1693
        %v1729 = vadd.f32 %v1728, %v1695
        %v1730 = vadd.f32 %v1729, %v1697
        %v1731 = vadd.f32 %v1730, %v1699
        %v1732 = vrot.slane %v1731, 4
        %v1733 = vadd.f32 %v1731, %v1732
        %v1734 = vrot.slane %v1733, 2
        %v1735 = vadd.f32 %v1733, %v1734
        %v1736 = vrot.slane %v1735, 1
        %v1737 = vadd.f32 %v1735, %v1736
        %v1738 = vadd.f32 %v1638, %v1640
        %v1739 = vadd.f32 %v1738, %v1642
        %v1740 = vadd.f32 %v1739, %v1644
        %v1741 = vadd.f32 %v1740, %v1646
        %v1742 = vadd.f32 %v1741, %v1648
        %v1743 = vadd.f32 %v1742, %v1650
        %v1744 = vadd.f32 %v1743, %v1652
        %v1745 = vadd.f32 %v1744, %v1654
        %v1746 = vadd.f32 %v1745, %v1656
        %v1747 = vadd.f32 %v1746, %v1658
        %v1748 = vadd.f32 %v1747, %v1660
        %v1749 = vadd.f32 %v1748, %v1662
        %v1750 = vadd.f32 %v1749, %v1664
        %v1751 = vadd.f32 %v1750, %v1666
        %v1752 = vadd.f32 %v1751, %v1668
        %v1753 = vadd.f32 %v1752, %v1670
        %v1754 = vadd.f32 %v1753, %v1672
        %v1755 = vadd.f32 %v1754, %v1674
        %v1756 = vadd.f32 %v1755, %v1676
        %v1757 = vadd.f32 %v1756, %v1678
        %v1758 = vadd.f32 %v1757, %v1680
        %v1759 = vadd.f32 %v1758, %v1682
        %v1760 = vadd.f32 %v1759, %v1684
        %v1761 = vadd.f32 %v1760, %v1686
        %v1762 = vadd.f32 %v1761, %v1688
        %v1763 = vadd.f32 %v1762, %v1690
        %v1764 = vadd.f32 %v1763, %v1692
        %v1765 = vadd.f32 %v1764, %v1694
        %v1766 = vadd.f32 %v1765, %v1696
        %v1767 = vadd.f32 %v1766, %v1698
        %v1768 = vadd.f32 %v1767, %v1700
        %v1769 = vrot.slane %v1768, 4
        %v1770 = vadd.f32 %v1768, %v1769
        %v1771 = vrot.slane %v1770, 2
        %v1772 = vadd.f32 %v1770, %v1771
        %v1773 = vrot.slane %v1772, 1
        %v1774 = vadd.f32 %v1772, %v1773
        %v1775 = vld [vmem:[#allocation2] sm:$0x1]
        %1777 = vset.pattern.permute.xlu0 0
        %1778 = vperm.xlu0 %1777, %v1775
        %v1779 = vpop.permute.xlu0 %1778
        %v1781 = vlaneseq
        %v1782 = vshrl.u32 %v1781, 7
        %v1783 = vsub.s32 0, %v1782
        %v1784 = vrot.slane %v1779, %v1783
        %v1785 = vadd.f32 %v1737, %v1784
        %v1786 = vadd.f32 %v1774, %v1784
        %v1789 = vcombine.low %v1785, %v1786
        %v1791 = vunpack.c.l.s4 1966171168
        %v1792 = vunpack.c.0.s8 %v1791
        %v1793 = vlaneseq
        %v1794 = vshrl.u32 %v1793, 7
        %v1795 = vsub.s32 %v1792, %v1794
        %v1796 = vrot.slane %v1789, %v1795
        %v1798 = vunpack.c.l.s4 1966171168
        %v1799 = vunpack.c.0.s8 %v1798
        %v1800 = vlaneseq
        %v1801 = vshrl.u32 %v1800, 7
        %v1802 = vsub.s32 %v1799, %v1801
        %v1803 = vrot.slane %v1796, %v1802
        %v1805 = vlaneseq
        %vm1806 = vcmp.ge.s32.totalorder %v1805, 0
        %vm1807 = vcmp.lt.s32.totalorder %v1805, 256
        %vm1808 = vmand %vm1806, %vm1807
        %1809 = vst.msk [vmem:[%s370] sm:$0x3] %vm1808, %v1803
        %s1810 = sand.u32 %s227, 1
        %s1811 = scalar_lea.sflag [#allocation5], %s1810
        %s1812 = sand.u32 %s227, 1
        %s1813 = smul.addr %s1812, 2
        %s1814 = scalar_lea.vmem [#allocation4], %s1813
        // Predicated region
        $region80: #{tpu_custom_call.1} parent=74 // pred_check
          %p1815 = pneg %p237
        $region81: #{tpu_custom_call.1} parent=74 // pred_check_branch
          %1817 = sbr.rel (%p1815) target = $region83
        $region82: #{tpu_custom_call.1} parent=74 // pred_region
          %s1818 = smul.u32 2, %s25
          %s1820 = ssub.s32 32, 32
          %1821 = vsyncadd %s1811, %s1820
          %s1822 = smul.addr %s1818, 16
          %s1823 = scalar_lea.hbm %s9, %s1822
          %s1825 = sshll.u32 %s1814, 4
          %s1826 = int_to_ptr.vmem [resolvable:$true] %s1825
          %1828 = dma.vmem_to_hbm [thread:$0]  %s1826, 32, %s1823, %s1811
        $region83: #{tpu_custom_call.1} parent=74 // pred_fallthru
          _
      $region75: #{tpu_custom_call.1} parent=5 // pred_fallthru
        _
      %p1829 = scmp.le.s32.totalorder 2, %s20
      // Predicated region
      $region84: #{tpu_custom_call.1} parent=5 // pred_check
        %p1830 = pneg %p1829
      $region85: #{tpu_custom_call.1} parent=5 // pred_check_branch
        %1832 = sbr.rel (%p1830) target = $region87
      $region86: #{tpu_custom_call.1} parent=5 // pred_region
        %s1833 = ssub.s32 %s20, 2
        // Predicated region
        $region88: #{tpu_custom_call.1} parent=86 // pred_check
          %p1834 = pneg %p243
        $region89: #{tpu_custom_call.1} parent=86 // pred_check_branch
          %1836 = sbr.rel (%p1834) target = $region91
        $region90: #{tpu_custom_call.1} parent=86 // pred_region
          %s1837 = sand.u32 %s228, 1
          %s1838 = scalar_lea.sflag [#allocation5], %s1837
          %s1839 = sand.u32 %s228, 1
          %s1840 = smul.addr %s1839, 2
          %s1841 = scalar_lea.vmem [#allocation4], %s1840
          %1842 = dma.done %s1838, 32
        $region91: #{tpu_custom_call.1} parent=86 // pred_fallthru
          _
      $region87: #{tpu_custom_call.1} parent=5 // pred_fallthru
        _
    $region6: #{tpu_custom_call.1} parent=1 // loop_footer
      %s24 = sadd.s32 1, %s20
    $region7: #{tpu_custom_call.1} parent=1 // loop_footer_branch
      %19 = sbr.rel target = $region3
    $region8: #{tpu_custom_call.1} parent=1 // loop_exit
      _
    %1843 = vsyncpa [#allocation5], 1
    %s1844 = scalar_lea.sflag [#allocation5], 1
    %1845 = vsyncpa %s1844, 1

</llo_original>
